<compile_context>
chip_gen: v5e
topology: v5e:2x2
jax: 0.10.0
libtpu: 0.0.40
codegen_flags: <defaults>
</compile_context>

<pallas_src>
import numpy as np
import jax
import jax.numpy as jnp
from jax import lax
from jax.experimental import pallas as pl
from jax.experimental.pallas import tpu as pltpu


def _ceil8(c):
    return ((c + 7) // 8) * 8


# ----------------------------------------------------------------------------
# Interp matrix: circular width pad + bilinear (align_corners=False) + crop
# folded into a single (W, out_w) matmul operand.
# ----------------------------------------------------------------------------
def make_interp_matrix(W, factor):
    out_w = W * factor
    Wp = W + 2

    def orig(i):                      # padded index -> original (circular) index
        if i == 0:
            return W - 1
        if i == Wp - 1:
            return 0
        return i - 1

    M = np.zeros((W, out_w), dtype=np.float32)
    for jp in range(out_w):
        j = jp + factor               # position in the uncropped factor*(W+2) output
        src = (j + 0.5) / factor - 0.5
        src = max(src, 0.0)
        i0 = int(np.floor(src))
        i1 = min(i0 + 1, Wp - 1)
        w1 = src - i0
        M[orig(i0), jp] += 1.0 - w1
        M[orig(i1), jp] += w1
    return jnp.asarray(M)


# ----------------------------------------------------------------------------
# Fused kernel: 3x (conv s=(2,1) + folded-BN bias + PReLU) -> width interp.
# All intermediates are lane-dense channel-major values resident in VMEM.
# ----------------------------------------------------------------------------
def _make_slicing_kernel(H, W, C3, out_w):
    H1, H2, H3 = H // 2, H // 4, H // 8

    def conv_bn_prelu_full(x, Hin, w_ref, b_ref, a_ref):
        """Stride-1 3x3 conv + bias + PReLU on a lane-flat (Cin, Hin*W) activation."""
        L = Hin * W
        Pout = w_ref.shape[1]
        # Zero halo: one fake row (+1 lane) on each side, so every (dh, dw) tap below is a
        # contiguous STATIC lane slice (no padded scratch, no scatter/gather).
        zpad = jnp.zeros((x.shape[0], W + 1), jnp.float32)
        xp = jnp.concatenate([zpad, x, zpad], axis=1)            # (Cin, L + 2W + 2)
        col = lax.broadcasted_iota(jnp.int32, (1, L), 1) % W     # hoisted width-boundary mask
        acc = jnp.zeros((Pout, L), jnp.float32)
        k = 0
        for dh in (-1, 0, 1):
            for dw in (-1, 0, 1):
                off = (W + 1) + dh * W + dw                      # static offset
                t = xp[:, off:off + L]                           # (Cin, L) contiguous slice
                if dw == -1:                                     # kill wrap across row boundary
                    t = jnp.where(col > 0, t, 0.0)
                elif dw == 1:
                    t = jnp.where(col < W - 1, t, 0.0)
                # 9 accumulated dots with sublane-aligned (Pout, Cin) taps; output stays
                # channel-major => lane-dense (Pout, L).
                acc = acc + jnp.dot(w_ref[k], t, preferred_element_type=jnp.float32)
                k += 1
        acc = acc + b_ref[...]                                   # folded-BN bias (Pout, 1)
        return jnp.where(acc >= 0.0, acc, a_ref[...] * acc)      # per-channel PReLU

    def keep_even_rows(y, Ho):
        # stride-2 H selection on the lane-flat layout: static whole-chunk copies.
        return jnp.concatenate(
            [y[:, (2 * m) * W:(2 * m + 1) * W] for m in range(Ho)], axis=1)

    def kernel(x_ref, w1_ref, b1_ref, a1_ref, w2_ref, b2_ref, a2_ref,
               w3_ref, b3_ref, a3_ref, m_ref, o_ref):
        x0 = x_ref[0]                                            # (C0, H*W) already lane-flat
        y1 = keep_even_rows(conv_bn_prelu_full(x0, H, w1_ref, b1_ref, a1_ref), H1)
        y2 = keep_even_rows(conv_bn_prelu_full(y1, H1, w2_ref, b2_ref, a2_ref), H2)
        y3 = keep_even_rows(conv_bn_prelu_full(y2, H2, w3_ref, b3_ref, a3_ref), H3)

        # Width interp (circular pad + bilinear + crop folded into M) as ONE matmul:
        # stack the H3 row-chunks along sublanes -> (H3*P3, W) @ (W, OW).
        P3 = y3.shape[0]
        stacked = jnp.concatenate([y3[:, h * W:(h + 1) * W] for h in range(H3)], axis=0)
        res = jnp.dot(stacked, m_ref[...], preferred_element_type=jnp.float32)  # (H3*P3, OW)
        # Back to channel-major lane-dense (P3, H3*OW): place the 8-row blocks along lanes.
        out = jnp.concatenate([res[h * P3:(h + 1) * P3, :] for h in range(H3)], axis=1)
        o_ref[0] = out[:C3, :].astype(o_ref.dtype)

    return kernel


# ----------------------------------------------------------------------------
# Wrapper: NCHW in / NCHW out (like PyTorch).  Only free reshapes outside the kernel.
# ----------------------------------------------------------------------------
def slicing_forward(x_nchw, folded_params, out_c, out_w):
    N, C0, H, W = x_nchw.shape
    assert H % 8 == 0, "three stride-2 layers require H % 8 == 0"
    assert out_w % W == 0
    (w1, b1, a1), (w2, b2, a2), (w3, b3, a3) = folded_params
    C3 = out_c
    H3 = H // 8
    factor = out_w // W
    M = make_interp_matrix(W, factor)

    kernel = _make_slicing_kernel(H, W, C3, out_w)
    c2 = lambda n: (0, 0)
    c3 = lambda n: (0, 0, 0)

    out = pl.pallas_call(
        kernel,
        out_shape=jax.ShapeDtypeStruct((N, C3, H3 * out_w), x_nchw.dtype),
        grid=(N,),
        in_specs=[
            pl.BlockSpec((1, C0, H * W), lambda n: (n, 0, 0)),   # NCHW input (free reshape)
            pl.BlockSpec(tuple(w1.shape), c3),                   # layer-1 taps (9, P1, C0)
            pl.BlockSpec(tuple(b1.shape), c2),                   # layer-1 bias (P1, 1)
            pl.BlockSpec(tuple(a1.shape), c2),                   # layer-1 PReLU alpha (P1, 1)
            pl.BlockSpec(tuple(w2.shape), c3),
            pl.BlockSpec(tuple(b2.shape), c2),
            pl.BlockSpec(tuple(a2.shape), c2),
            pl.BlockSpec(tuple(w3.shape), c3),
            pl.BlockSpec(tuple(b3.shape), c2),
            pl.BlockSpec(tuple(a3.shape), c2),
            pl.BlockSpec((W, out_w), c2),                        # interp matrix (resident)
        ],
        out_specs=pl.BlockSpec((1, C3, H3 * out_w), lambda n: (n, 0, 0)),
        compiler_params=pltpu.CompilerParams(
            dimension_semantics=("parallel",)),                  # batch -> both v7x cores
    )(x_nchw.reshape(N, C0, H * W), w1, b1, a1, w2, b2, a2, w3, b3, a3, M)

    return out.reshape(N, C3, H3, out_w)                         # free reshape -> NCHW


# ----------------------------------------------------------------------------
# Deterministic synthetic parameters + eval-mode BN folding into the conv weights
# ----------------------------------------------------------------------------
def init_raw_params(key, in_c, out_c):
    chans = [in_c, in_c // 2, in_c // 4, out_c]
    raw = []
    for li in range(3):
        ci, co = chans[li], chans[li + 1]
        key, k1, k2, k3, k4, k5 = jax.random.split(key, 6)
        w = jax.random.normal(k1, (3, 3, ci, co), jnp.float32) / np.sqrt(9.0 * ci)  # HWIO
        gamma = 1.0 + 0.1 * jax.random.normal(k2, (co,), jnp.float32)
        beta = 0.1 * jax.random.normal(k3, (co,), jnp.float32)
        mean = 0.1 * jax.random.normal(k4, (co,), jnp.float32)
        var = jnp.abs(jax.random.normal(k5, (co,), jnp.float32)) + 0.5
        alpha = jnp.full((co,), 0.25, jnp.float32)                # PyTorch PReLU default
        raw.append((w, gamma, beta, mean, var, alpha))
    return raw


def fold_params(raw, eps=1e-5):
    """Fold eval-mode BN into the conv weights and pad to sublane-aligned tap matrices."""
    folded = []
    for li, (w, gamma, beta, mean, var, alpha) in enumerate(raw):
        ci, co = w.shape[2], w.shape[3]
        scale = gamma / jnp.sqrt(var + eps)                       # eval-mode BN
        bias = beta - mean * scale
        # per-tap channel-major matrices: taps[k][co, ci] = w[kh, kw, ci, co] * scale[co]
        taps = jnp.transpose(w * scale, (0, 1, 3, 2)).reshape(9, co, ci)
        co_p = _ceil8(co)
        ci_p = ci if li == 0 else _ceil8(ci)      # layer-0 rhs comes straight from HBM (C0 rows)
        taps = jnp.pad(taps, ((0, 0), (0, co_p - co), (0, ci_p - ci)))
        b = jnp.pad(bias, (0, co_p - co)).reshape(co_p, 1)
        a = jnp.pad(alpha, (0, co_p - co)).reshape(co_p, 1)       # padded channels -> exact 0
        folded.append((taps, b, a))
    return folded


# ----------------------------------------------------------------------------
# Pure-JAX reference (independent of the kernel's BN fold / tap layout)
# ----------------------------------------------------------------------------
def ref_forward(x_nchw, raw_params, out_w, eps=1e-5):
    x = jnp.transpose(x_nchw, (0, 2, 3, 1))
    for (w, gamma, beta, mean, var, alpha) in raw_params:
        x = lax.conv_general_dilated(
            x, w, window_strides=(2, 1), padding=((1, 1), (1, 1)),
            dimension_numbers=("NHWC", "HWIO", "NHWC"),
            precision=lax.Precision.HIGHEST)
        scale = gamma / jnp.sqrt(var + eps)
        x = x * scale + (beta - mean * scale)
        x = jnp.where(x >= 0, x, alpha * x)
    N, H3, W, C3 = x.shape
    M = make_interp_matrix(W, out_w // W)
    y = jnp.einsum("nhwc,wo->nhoc", x, M, precision=lax.Precision.HIGHEST)
    return jnp.transpose(y, (0, 3, 1, 2))


if __name__ == "__main__":
    N, in_c, H, W = 2, 8, 16, 16
    out_c, out_w = 4, 32

    x = jax.random.normal(jax.random.PRNGKey(0), (N, in_c, H, W), jnp.float32)
    raw = init_raw_params(jax.random.PRNGKey(1), in_c, out_c)

    y = slicing_forward(x, fold_params(raw), out_c, out_w)
    y = jax.block_until_ready(y)

    assert y.shape == (N, out_c, H // 8, out_w), y.shape
    y_ref = ref_forward(x, raw, out_w)
    np.testing.assert_allclose(np.asarray(y), np.asarray(y_ref), rtol=2e-4, atol=2e-4)

    print("KERNEL_OK")
</pallas_src>

<mosaic_0001>
module attributes {stable_mosaic.version = 11 : i64} {
  func.func @kernel(%arg0: i32, %arg1: memref<1x8x256xf32, #tpu.memory_space<vmem>>, %arg2: memref<9x8x8xf32, #tpu.memory_space<vmem>>, %arg3: memref<8x1xf32, #tpu.memory_space<vmem>>, %arg4: memref<8x1xf32, #tpu.memory_space<vmem>>, %arg5: memref<9x8x8xf32, #tpu.memory_space<vmem>>, %arg6: memref<8x1xf32, #tpu.memory_space<vmem>>, %arg7: memref<8x1xf32, #tpu.memory_space<vmem>>, %arg8: memref<9x8x8xf32, #tpu.memory_space<vmem>>, %arg9: memref<8x1xf32, #tpu.memory_space<vmem>>, %arg10: memref<8x1xf32, #tpu.memory_space<vmem>>, %arg11: memref<16x32xf32, #tpu.memory_space<vmem>>, %arg12: memref<1x4x64xf32, #tpu.memory_space<vmem>>) attributes {dimension_semantics = [#tpu.dimension_semantics<parallel>], iteration_bounds = array<i64: 2>, scalar_prefetch = 0 : i64, scratch_operands = 0 : i64, tpu.core_type = #tpu.core_type<tc>, window_params = [{transform_indices = @transform_0, window_bounds = array<i64: 1, 8, 256>}, {pipeline_mode = #tpu.pipeline_mode<synchronous>, transform_indices = @transform_1, window_bounds = array<i64: 9, 8, 8>}, {pipeline_mode = #tpu.pipeline_mode<synchronous>, transform_indices = @transform_2, window_bounds = array<i64: 8, 1>}, {pipeline_mode = #tpu.pipeline_mode<synchronous>, transform_indices = @transform_3, window_bounds = array<i64: 8, 1>}, {pipeline_mode = #tpu.pipeline_mode<synchronous>, transform_indices = @transform_4, window_bounds = array<i64: 9, 8, 8>}, {pipeline_mode = #tpu.pipeline_mode<synchronous>, transform_indices = @transform_5, window_bounds = array<i64: 8, 1>}, {pipeline_mode = #tpu.pipeline_mode<synchronous>, transform_indices = @transform_6, window_bounds = array<i64: 8, 1>}, {pipeline_mode = #tpu.pipeline_mode<synchronous>, transform_indices = @transform_7, window_bounds = array<i64: 9, 8, 8>}, {pipeline_mode = #tpu.pipeline_mode<synchronous>, transform_indices = @transform_8, window_bounds = array<i64: 8, 1>}, {pipeline_mode = #tpu.pipeline_mode<synchronous>, transform_indices = @transform_9, window_bounds = array<i64: 8, 1>}, {pipeline_mode = #tpu.pipeline_mode<synchronous>, transform_indices = @transform_10, window_bounds = array<i64: 16, 32>}, {transform_indices = @transform_11, window_bounds = array<i64: 1, 4, 64>}]} {
    %c0 = arith.constant 0 : index
    %c0_0 = arith.constant 0 : index
    %c0_1 = arith.constant 0 : index
    %0 = vector.load %arg1[%c0, %c0_0, %c0_1] : memref<1x8x256xf32, #tpu.memory_space<vmem>>, vector<1x8x256xf32>
    %1 = vector.shape_cast %0 : vector<1x8x256xf32> to vector<8x256xf32>
    %cst = arith.constant 0.000000e+00 : f32
    %2 = vector.broadcast %cst : f32 to vector<8x17xf32>
    %3 = tpu.concatenate %2, %1, %2 in 1 : vector<8x17xf32>, vector<8x256xf32>, vector<8x17xf32> -> vector<8x290xf32>
    %4 = tpu.iota {dimensions = array<i32: 1>} : vector<1x256xi32>
    %c16_i32 = arith.constant 16 : i32
    %c0_i32 = arith.constant 0 : i32
    %5 = arith.cmpi eq, %c16_i32, %c0_i32 : i32
    %c1_i32 = arith.constant 1 : i32
    %6 = arith.select %5, %c1_i32, %c16_i32 : i32
    %7 = vector.broadcast %6 : i32 to vector<1x256xi32>
    %8 = arith.remsi %4, %7 : vector<1x256xi32>
    %c0_i32_2 = arith.constant 0 : i32
    %9 = vector.broadcast %c0_i32_2 : i32 to vector<1x256xi32>
    %10 = arith.cmpi ne, %8, %9 : vector<1x256xi32>
    %c0_i32_3 = arith.constant 0 : i32
    %11 = vector.broadcast %c0_i32_3 : i32 to vector<1x256xi32>
    %12 = arith.cmpi slt, %8, %11 : vector<1x256xi32>
    %c0_i32_4 = arith.constant 0 : i32
    %13 = arith.cmpi slt, %6, %c0_i32_4 : i32
    %14 = vector.broadcast %13 : i1 to vector<1x256xi1>
    %15 = vector.broadcast %14 : vector<1x256xi1> to vector<1x256xi1>
    %16 = arith.xori %12, %15 : vector<1x256xi1>
    %17 = arith.andi %16, %10 : vector<1x256xi1>
    %18 = vector.broadcast %6 : i32 to vector<1x256xi32>
    %19 = arith.addi %8, %18 : vector<1x256xi32>
    %20 = arith.select %17, %19, %8 : vector<1x256xi1>, vector<1x256xi32>
    %cst_5 = arith.constant 0.000000e+00 : f32
    %21 = vector.broadcast %cst_5 : f32 to vector<8x256xf32>
    %22 = vector.extract_strided_slice %3 {offsets = [0, 0], sizes = [8, 256], strides = [1, 1]} : vector<8x290xf32> to vector<8x256xf32>
    %c0_i32_6 = arith.constant 0 : i32
    %23 = vector.broadcast %c0_i32_6 : i32 to vector<1x256xi32>
    %24 = arith.cmpi sgt, %20, %23 : vector<1x256xi32>
    %cst_7 = arith.constant 0.000000e+00 : f32
    %25 = vector.shape_cast %24 : vector<1x256xi1> to vector<1x256xi1>
    %26 = vector.broadcast %25 : vector<1x256xi1> to vector<8x256xi1>
    %27 = vector.broadcast %cst_7 : f32 to vector<8x256xf32>
    %28 = arith.select %26, %22, %27 : vector<8x256xi1>, vector<8x256xf32>
    %c0_8 = arith.constant 0 : index
    %c0_9 = arith.constant 0 : index
    %c0_10 = arith.constant 0 : index
    %29 = vector.load %arg2[%c0_8, %c0_9, %c0_10] : memref<9x8x8xf32, #tpu.memory_space<vmem>>, vector<1x8x8xf32>
    %30 = vector.shape_cast %29 : vector<1x8x8xf32> to vector<8x8xf32>
    %cst_11 = arith.constant dense<0.000000e+00> : vector<8x256xf32>
    %31 = tpu.matmul %30, %28, %cst_11 {dimension_numbers = #tpu.dot_dimension_numbers<[1], [0], [0], [1], [0, 0, 1, 1], [], []>} : vector<8x8xf32>, vector<8x256xf32>, vector<8x256xf32> -> vector<8x256xf32>
    %32 = arith.addf %21, %31 : vector<8x256xf32>
    %33 = vector.extract_strided_slice %3 {offsets = [0, 1], sizes = [8, 256], strides = [1, 1]} : vector<8x290xf32> to vector<8x256xf32>
    %c1 = arith.constant 1 : index
    %c0_12 = arith.constant 0 : index
    %c0_13 = arith.constant 0 : index
    %34 = vector.load %arg2[%c1, %c0_12, %c0_13] : memref<9x8x8xf32, #tpu.memory_space<vmem>>, vector<1x8x8xf32>
    %35 = vector.shape_cast %34 : vector<1x8x8xf32> to vector<8x8xf32>
    %cst_14 = arith.constant dense<0.000000e+00> : vector<8x256xf32>
    %36 = tpu.matmul %35, %33, %cst_14 {dimension_numbers = #tpu.dot_dimension_numbers<[1], [0], [0], [1], [0, 0, 1, 1], [], []>} : vector<8x8xf32>, vector<8x256xf32>, vector<8x256xf32> -> vector<8x256xf32>
    %37 = arith.addf %32, %36 : vector<8x256xf32>
    %38 = vector.extract_strided_slice %3 {offsets = [0, 2], sizes = [8, 256], strides = [1, 1]} : vector<8x290xf32> to vector<8x256xf32>
    %c15_i32 = arith.constant 15 : i32
    %39 = vector.broadcast %c15_i32 : i32 to vector<1x256xi32>
    %40 = arith.cmpi slt, %20, %39 : vector<1x256xi32>
    %cst_15 = arith.constant 0.000000e+00 : f32
    %41 = vector.shape_cast %40 : vector<1x256xi1> to vector<1x256xi1>
    %42 = vector.broadcast %41 : vector<1x256xi1> to vector<8x256xi1>
    %43 = vector.broadcast %cst_15 : f32 to vector<8x256xf32>
    %44 = arith.select %42, %38, %43 : vector<8x256xi1>, vector<8x256xf32>
    %c2 = arith.constant 2 : index
    %c0_16 = arith.constant 0 : index
    %c0_17 = arith.constant 0 : index
    %45 = vector.load %arg2[%c2, %c0_16, %c0_17] : memref<9x8x8xf32, #tpu.memory_space<vmem>>, vector<1x8x8xf32>
    %46 = vector.shape_cast %45 : vector<1x8x8xf32> to vector<8x8xf32>
    %cst_18 = arith.constant dense<0.000000e+00> : vector<8x256xf32>
    %47 = tpu.matmul %46, %44, %cst_18 {dimension_numbers = #tpu.dot_dimension_numbers<[1], [0], [0], [1], [0, 0, 1, 1], [], []>} : vector<8x8xf32>, vector<8x256xf32>, vector<8x256xf32> -> vector<8x256xf32>
    %48 = arith.addf %37, %47 : vector<8x256xf32>
    %49 = vector.extract_strided_slice %3 {offsets = [0, 16], sizes = [8, 256], strides = [1, 1]} : vector<8x290xf32> to vector<8x256xf32>
    %c0_i32_19 = arith.constant 0 : i32
    %50 = vector.broadcast %c0_i32_19 : i32 to vector<1x256xi32>
    %51 = arith.cmpi sgt, %20, %50 : vector<1x256xi32>
    %cst_20 = arith.constant 0.000000e+00 : f32
    %52 = vector.shape_cast %51 : vector<1x256xi1> to vector<1x256xi1>
    %53 = vector.broadcast %52 : vector<1x256xi1> to vector<8x256xi1>
    %54 = vector.broadcast %cst_20 : f32 to vector<8x256xf32>
    %55 = arith.select %53, %49, %54 : vector<8x256xi1>, vector<8x256xf32>
    %c3 = arith.constant 3 : index
    %c0_21 = arith.constant 0 : index
    %c0_22 = arith.constant 0 : index
    %56 = vector.load %arg2[%c3, %c0_21, %c0_22] : memref<9x8x8xf32, #tpu.memory_space<vmem>>, vector<1x8x8xf32>
    %57 = vector.shape_cast %56 : vector<1x8x8xf32> to vector<8x8xf32>
    %cst_23 = arith.constant dense<0.000000e+00> : vector<8x256xf32>
    %58 = tpu.matmul %57, %55, %cst_23 {dimension_numbers = #tpu.dot_dimension_numbers<[1], [0], [0], [1], [0, 0, 1, 1], [], []>} : vector<8x8xf32>, vector<8x256xf32>, vector<8x256xf32> -> vector<8x256xf32>
    %59 = arith.addf %48, %58 : vector<8x256xf32>
    %60 = vector.extract_strided_slice %3 {offsets = [0, 17], sizes = [8, 256], strides = [1, 1]} : vector<8x290xf32> to vector<8x256xf32>
    %c4 = arith.constant 4 : index
    %c0_24 = arith.constant 0 : index
    %c0_25 = arith.constant 0 : index
    %61 = vector.load %arg2[%c4, %c0_24, %c0_25] : memref<9x8x8xf32, #tpu.memory_space<vmem>>, vector<1x8x8xf32>
    %62 = vector.shape_cast %61 : vector<1x8x8xf32> to vector<8x8xf32>
    %cst_26 = arith.constant dense<0.000000e+00> : vector<8x256xf32>
    %63 = tpu.matmul %62, %60, %cst_26 {dimension_numbers = #tpu.dot_dimension_numbers<[1], [0], [0], [1], [0, 0, 1, 1], [], []>} : vector<8x8xf32>, vector<8x256xf32>, vector<8x256xf32> -> vector<8x256xf32>
    %64 = arith.addf %59, %63 : vector<8x256xf32>
    %65 = vector.extract_strided_slice %3 {offsets = [0, 18], sizes = [8, 256], strides = [1, 1]} : vector<8x290xf32> to vector<8x256xf32>
    %c15_i32_27 = arith.constant 15 : i32
    %66 = vector.broadcast %c15_i32_27 : i32 to vector<1x256xi32>
    %67 = arith.cmpi slt, %20, %66 : vector<1x256xi32>
    %cst_28 = arith.constant 0.000000e+00 : f32
    %68 = vector.shape_cast %67 : vector<1x256xi1> to vector<1x256xi1>
    %69 = vector.broadcast %68 : vector<1x256xi1> to vector<8x256xi1>
    %70 = vector.broadcast %cst_28 : f32 to vector<8x256xf32>
    %71 = arith.select %69, %65, %70 : vector<8x256xi1>, vector<8x256xf32>
    %c5 = arith.constant 5 : index
    %c0_29 = arith.constant 0 : index
    %c0_30 = arith.constant 0 : index
    %72 = vector.load %arg2[%c5, %c0_29, %c0_30] : memref<9x8x8xf32, #tpu.memory_space<vmem>>, vector<1x8x8xf32>
    %73 = vector.shape_cast %72 : vector<1x8x8xf32> to vector<8x8xf32>
    %cst_31 = arith.constant dense<0.000000e+00> : vector<8x256xf32>
    %74 = tpu.matmul %73, %71, %cst_31 {dimension_numbers = #tpu.dot_dimension_numbers<[1], [0], [0], [1], [0, 0, 1, 1], [], []>} : vector<8x8xf32>, vector<8x256xf32>, vector<8x256xf32> -> vector<8x256xf32>
    %75 = arith.addf %64, %74 : vector<8x256xf32>
    %76 = vector.extract_strided_slice %3 {offsets = [0, 32], sizes = [8, 256], strides = [1, 1]} : vector<8x290xf32> to vector<8x256xf32>
    %c0_i32_32 = arith.constant 0 : i32
    %77 = vector.broadcast %c0_i32_32 : i32 to vector<1x256xi32>
    %78 = arith.cmpi sgt, %20, %77 : vector<1x256xi32>
    %cst_33 = arith.constant 0.000000e+00 : f32
    %79 = vector.shape_cast %78 : vector<1x256xi1> to vector<1x256xi1>
    %80 = vector.broadcast %79 : vector<1x256xi1> to vector<8x256xi1>
    %81 = vector.broadcast %cst_33 : f32 to vector<8x256xf32>
    %82 = arith.select %80, %76, %81 : vector<8x256xi1>, vector<8x256xf32>
    %c6 = arith.constant 6 : index
    %c0_34 = arith.constant 0 : index
    %c0_35 = arith.constant 0 : index
    %83 = vector.load %arg2[%c6, %c0_34, %c0_35] : memref<9x8x8xf32, #tpu.memory_space<vmem>>, vector<1x8x8xf32>
    %84 = vector.shape_cast %83 : vector<1x8x8xf32> to vector<8x8xf32>
    %cst_36 = arith.constant dense<0.000000e+00> : vector<8x256xf32>
    %85 = tpu.matmul %84, %82, %cst_36 {dimension_numbers = #tpu.dot_dimension_numbers<[1], [0], [0], [1], [0, 0, 1, 1], [], []>} : vector<8x8xf32>, vector<8x256xf32>, vector<8x256xf32> -> vector<8x256xf32>
    %86 = arith.addf %75, %85 : vector<8x256xf32>
    %87 = vector.extract_strided_slice %3 {offsets = [0, 33], sizes = [8, 256], strides = [1, 1]} : vector<8x290xf32> to vector<8x256xf32>
    %c7 = arith.constant 7 : index
    %c0_37 = arith.constant 0 : index
    %c0_38 = arith.constant 0 : index
    %88 = vector.load %arg2[%c7, %c0_37, %c0_38] : memref<9x8x8xf32, #tpu.memory_space<vmem>>, vector<1x8x8xf32>
    %89 = vector.shape_cast %88 : vector<1x8x8xf32> to vector<8x8xf32>
    %cst_39 = arith.constant dense<0.000000e+00> : vector<8x256xf32>
    %90 = tpu.matmul %89, %87, %cst_39 {dimension_numbers = #tpu.dot_dimension_numbers<[1], [0], [0], [1], [0, 0, 1, 1], [], []>} : vector<8x8xf32>, vector<8x256xf32>, vector<8x256xf32> -> vector<8x256xf32>
    %91 = arith.addf %86, %90 : vector<8x256xf32>
    %92 = vector.extract_strided_slice %3 {offsets = [0, 34], sizes = [8, 256], strides = [1, 1]} : vector<8x290xf32> to vector<8x256xf32>
    %c15_i32_40 = arith.constant 15 : i32
    %93 = vector.broadcast %c15_i32_40 : i32 to vector<1x256xi32>
    %94 = arith.cmpi slt, %20, %93 : vector<1x256xi32>
    %cst_41 = arith.constant 0.000000e+00 : f32
    %95 = vector.shape_cast %94 : vector<1x256xi1> to vector<1x256xi1>
    %96 = vector.broadcast %95 : vector<1x256xi1> to vector<8x256xi1>
    %97 = vector.broadcast %cst_41 : f32 to vector<8x256xf32>
    %98 = arith.select %96, %92, %97 : vector<8x256xi1>, vector<8x256xf32>
    %c8 = arith.constant 8 : index
    %c0_42 = arith.constant 0 : index
    %c0_43 = arith.constant 0 : index
    %99 = vector.load %arg2[%c8, %c0_42, %c0_43] : memref<9x8x8xf32, #tpu.memory_space<vmem>>, vector<1x8x8xf32>
    %100 = vector.shape_cast %99 : vector<1x8x8xf32> to vector<8x8xf32>
    %cst_44 = arith.constant dense<0.000000e+00> : vector<8x256xf32>
    %101 = tpu.matmul %100, %98, %cst_44 {dimension_numbers = #tpu.dot_dimension_numbers<[1], [0], [0], [1], [0, 0, 1, 1], [], []>} : vector<8x8xf32>, vector<8x256xf32>, vector<8x256xf32> -> vector<8x256xf32>
    %102 = arith.addf %91, %101 : vector<8x256xf32>
    %c0_45 = arith.constant 0 : index
    %c0_46 = arith.constant 0 : index
    %103 = vector.load %arg3[%c0_45, %c0_46] : memref<8x1xf32, #tpu.memory_space<vmem>>, vector<8x1xf32>
    %104 = vector.broadcast %103 : vector<8x1xf32> to vector<8x256xf32>
    %105 = arith.addf %102, %104 : vector<8x256xf32>
    %cst_47 = arith.constant 0.000000e+00 : f32
    %106 = vector.broadcast %cst_47 : f32 to vector<8x256xf32>
    %107 = arith.cmpf oge, %105, %106 : vector<8x256xf32>
    %c0_48 = arith.constant 0 : index
    %c0_49 = arith.constant 0 : index
    %108 = vector.load %arg4[%c0_48, %c0_49] : memref<8x1xf32, #tpu.memory_space<vmem>>, vector<8x1xf32>
    %109 = vector.broadcast %108 : vector<8x1xf32> to vector<8x256xf32>
    %110 = arith.mulf %109, %105 : vector<8x256xf32>
    %111 = arith.select %107, %105, %110 : vector<8x256xi1>, vector<8x256xf32>
    %112 = vector.extract_strided_slice %111 {offsets = [0, 0], sizes = [8, 16], strides = [1, 1]} : vector<8x256xf32> to vector<8x16xf32>
    %113 = vector.extract_strided_slice %111 {offsets = [0, 32], sizes = [8, 16], strides = [1, 1]} : vector<8x256xf32> to vector<8x16xf32>
    %114 = vector.extract_strided_slice %111 {offsets = [0, 64], sizes = [8, 16], strides = [1, 1]} : vector<8x256xf32> to vector<8x16xf32>
    %115 = vector.extract_strided_slice %111 {offsets = [0, 96], sizes = [8, 16], strides = [1, 1]} : vector<8x256xf32> to vector<8x16xf32>
    %116 = vector.extract_strided_slice %111 {offsets = [0, 128], sizes = [8, 16], strides = [1, 1]} : vector<8x256xf32> to vector<8x16xf32>
    %117 = vector.extract_strided_slice %111 {offsets = [0, 160], sizes = [8, 16], strides = [1, 1]} : vector<8x256xf32> to vector<8x16xf32>
    %118 = vector.extract_strided_slice %111 {offsets = [0, 192], sizes = [8, 16], strides = [1, 1]} : vector<8x256xf32> to vector<8x16xf32>
    %119 = vector.extract_strided_slice %111 {offsets = [0, 224], sizes = [8, 16], strides = [1, 1]} : vector<8x256xf32> to vector<8x16xf32>
    %120 = tpu.concatenate %112, %113, %114, %115, %116, %117, %118, %119 in 1 : vector<8x16xf32>, vector<8x16xf32>, vector<8x16xf32>, vector<8x16xf32>, vector<8x16xf32>, vector<8x16xf32>, vector<8x16xf32>, vector<8x16xf32> -> vector<8x128xf32>
    %cst_50 = arith.constant 0.000000e+00 : f32
    %121 = vector.broadcast %cst_50 : f32 to vector<8x17xf32>
    %122 = tpu.concatenate %121, %120, %121 in 1 : vector<8x17xf32>, vector<8x128xf32>, vector<8x17xf32> -> vector<8x162xf32>
    %123 = tpu.iota {dimensions = array<i32: 1>} : vector<1x128xi32>
    %c16_i32_51 = arith.constant 16 : i32
    %c0_i32_52 = arith.constant 0 : i32
    %124 = arith.cmpi eq, %c16_i32_51, %c0_i32_52 : i32
    %c1_i32_53 = arith.constant 1 : i32
    %125 = arith.select %124, %c1_i32_53, %c16_i32_51 : i32
    %126 = vector.broadcast %125 : i32 to vector<1x128xi32>
    %127 = arith.remsi %123, %126 : vector<1x128xi32>
    %c0_i32_54 = arith.constant 0 : i32
    %128 = vector.broadcast %c0_i32_54 : i32 to vector<1x128xi32>
    %129 = arith.cmpi ne, %127, %128 : vector<1x128xi32>
    %c0_i32_55 = arith.constant 0 : i32
    %130 = vector.broadcast %c0_i32_55 : i32 to vector<1x128xi32>
    %131 = arith.cmpi slt, %127, %130 : vector<1x128xi32>
    %c0_i32_56 = arith.constant 0 : i32
    %132 = arith.cmpi slt, %125, %c0_i32_56 : i32
    %133 = vector.broadcast %132 : i1 to vector<1x128xi1>
    %134 = vector.broadcast %133 : vector<1x128xi1> to vector<1x128xi1>
    %135 = arith.xori %131, %134 : vector<1x128xi1>
    %136 = arith.andi %135, %129 : vector<1x128xi1>
    %137 = vector.broadcast %125 : i32 to vector<1x128xi32>
    %138 = arith.addi %127, %137 : vector<1x128xi32>
    %139 = arith.select %136, %138, %127 : vector<1x128xi1>, vector<1x128xi32>
    %cst_57 = arith.constant 0.000000e+00 : f32
    %140 = vector.broadcast %cst_57 : f32 to vector<8x128xf32>
    %141 = vector.extract_strided_slice %122 {offsets = [0, 0], sizes = [8, 128], strides = [1, 1]} : vector<8x162xf32> to vector<8x128xf32>
    %c0_i32_58 = arith.constant 0 : i32
    %142 = vector.broadcast %c0_i32_58 : i32 to vector<1x128xi32>
    %143 = arith.cmpi sgt, %139, %142 : vector<1x128xi32>
    %cst_59 = arith.constant 0.000000e+00 : f32
    %144 = vector.shape_cast %143 : vector<1x128xi1> to vector<1x128xi1>
    %145 = vector.broadcast %144 : vector<1x128xi1> to vector<8x128xi1>
    %146 = vector.broadcast %cst_59 : f32 to vector<8x128xf32>
    %147 = arith.select %145, %141, %146 : vector<8x128xi1>, vector<8x128xf32>
    %c0_60 = arith.constant 0 : index
    %c0_61 = arith.constant 0 : index
    %c0_62 = arith.constant 0 : index
    %148 = vector.load %arg5[%c0_60, %c0_61, %c0_62] : memref<9x8x8xf32, #tpu.memory_space<vmem>>, vector<1x8x8xf32>
    %149 = vector.shape_cast %148 : vector<1x8x8xf32> to vector<8x8xf32>
    %cst_63 = arith.constant dense<0.000000e+00> : vector<8x128xf32>
    %150 = tpu.matmul %149, %147, %cst_63 {dimension_numbers = #tpu.dot_dimension_numbers<[1], [0], [0], [1], [0, 0, 1, 1], [], []>} : vector<8x8xf32>, vector<8x128xf32>, vector<8x128xf32> -> vector<8x128xf32>
    %151 = arith.addf %140, %150 : vector<8x128xf32>
    %152 = vector.extract_strided_slice %122 {offsets = [0, 1], sizes = [8, 128], strides = [1, 1]} : vector<8x162xf32> to vector<8x128xf32>
    %c1_64 = arith.constant 1 : index
    %c0_65 = arith.constant 0 : index
    %c0_66 = arith.constant 0 : index
    %153 = vector.load %arg5[%c1_64, %c0_65, %c0_66] : memref<9x8x8xf32, #tpu.memory_space<vmem>>, vector<1x8x8xf32>
    %154 = vector.shape_cast %153 : vector<1x8x8xf32> to vector<8x8xf32>
    %cst_67 = arith.constant dense<0.000000e+00> : vector<8x128xf32>
    %155 = tpu.matmul %154, %152, %cst_67 {dimension_numbers = #tpu.dot_dimension_numbers<[1], [0], [0], [1], [0, 0, 1, 1], [], []>} : vector<8x8xf32>, vector<8x128xf32>, vector<8x128xf32> -> vector<8x128xf32>
    %156 = arith.addf %151, %155 : vector<8x128xf32>
    %157 = vector.extract_strided_slice %122 {offsets = [0, 2], sizes = [8, 128], strides = [1, 1]} : vector<8x162xf32> to vector<8x128xf32>
    %c15_i32_68 = arith.constant 15 : i32
    %158 = vector.broadcast %c15_i32_68 : i32 to vector<1x128xi32>
    %159 = arith.cmpi slt, %139, %158 : vector<1x128xi32>
    %cst_69 = arith.constant 0.000000e+00 : f32
    %160 = vector.shape_cast %159 : vector<1x128xi1> to vector<1x128xi1>
    %161 = vector.broadcast %160 : vector<1x128xi1> to vector<8x128xi1>
    %162 = vector.broadcast %cst_69 : f32 to vector<8x128xf32>
    %163 = arith.select %161, %157, %162 : vector<8x128xi1>, vector<8x128xf32>
    %c2_70 = arith.constant 2 : index
    %c0_71 = arith.constant 0 : index
    %c0_72 = arith.constant 0 : index
    %164 = vector.load %arg5[%c2_70, %c0_71, %c0_72] : memref<9x8x8xf32, #tpu.memory_space<vmem>>, vector<1x8x8xf32>
    %165 = vector.shape_cast %164 : vector<1x8x8xf32> to vector<8x8xf32>
    %cst_73 = arith.constant dense<0.000000e+00> : vector<8x128xf32>
    %166 = tpu.matmul %165, %163, %cst_73 {dimension_numbers = #tpu.dot_dimension_numbers<[1], [0], [0], [1], [0, 0, 1, 1], [], []>} : vector<8x8xf32>, vector<8x128xf32>, vector<8x128xf32> -> vector<8x128xf32>
    %167 = arith.addf %156, %166 : vector<8x128xf32>
    %168 = vector.extract_strided_slice %122 {offsets = [0, 16], sizes = [8, 128], strides = [1, 1]} : vector<8x162xf32> to vector<8x128xf32>
    %c0_i32_74 = arith.constant 0 : i32
    %169 = vector.broadcast %c0_i32_74 : i32 to vector<1x128xi32>
    %170 = arith.cmpi sgt, %139, %169 : vector<1x128xi32>
    %cst_75 = arith.constant 0.000000e+00 : f32
    %171 = vector.shape_cast %170 : vector<1x128xi1> to vector<1x128xi1>
    %172 = vector.broadcast %171 : vector<1x128xi1> to vector<8x128xi1>
    %173 = vector.broadcast %cst_75 : f32 to vector<8x128xf32>
    %174 = arith.select %172, %168, %173 : vector<8x128xi1>, vector<8x128xf32>
    %c3_76 = arith.constant 3 : index
    %c0_77 = arith.constant 0 : index
    %c0_78 = arith.constant 0 : index
    %175 = vector.load %arg5[%c3_76, %c0_77, %c0_78] : memref<9x8x8xf32, #tpu.memory_space<vmem>>, vector<1x8x8xf32>
    %176 = vector.shape_cast %175 : vector<1x8x8xf32> to vector<8x8xf32>
    %cst_79 = arith.constant dense<0.000000e+00> : vector<8x128xf32>
    %177 = tpu.matmul %176, %174, %cst_79 {dimension_numbers = #tpu.dot_dimension_numbers<[1], [0], [0], [1], [0, 0, 1, 1], [], []>} : vector<8x8xf32>, vector<8x128xf32>, vector<8x128xf32> -> vector<8x128xf32>
    %178 = arith.addf %167, %177 : vector<8x128xf32>
    %179 = vector.extract_strided_slice %122 {offsets = [0, 17], sizes = [8, 128], strides = [1, 1]} : vector<8x162xf32> to vector<8x128xf32>
    %c4_80 = arith.constant 4 : index
    %c0_81 = arith.constant 0 : index
    %c0_82 = arith.constant 0 : index
    %180 = vector.load %arg5[%c4_80, %c0_81, %c0_82] : memref<9x8x8xf32, #tpu.memory_space<vmem>>, vector<1x8x8xf32>
    %181 = vector.shape_cast %180 : vector<1x8x8xf32> to vector<8x8xf32>
    %cst_83 = arith.constant dense<0.000000e+00> : vector<8x128xf32>
    %182 = tpu.matmul %181, %179, %cst_83 {dimension_numbers = #tpu.dot_dimension_numbers<[1], [0], [0], [1], [0, 0, 1, 1], [], []>} : vector<8x8xf32>, vector<8x128xf32>, vector<8x128xf32> -> vector<8x128xf32>
    %183 = arith.addf %178, %182 : vector<8x128xf32>
    %184 = vector.extract_strided_slice %122 {offsets = [0, 18], sizes = [8, 128], strides = [1, 1]} : vector<8x162xf32> to vector<8x128xf32>
    %c15_i32_84 = arith.constant 15 : i32
    %185 = vector.broadcast %c15_i32_84 : i32 to vector<1x128xi32>
    %186 = arith.cmpi slt, %139, %185 : vector<1x128xi32>
    %cst_85 = arith.constant 0.000000e+00 : f32
    %187 = vector.shape_cast %186 : vector<1x128xi1> to vector<1x128xi1>
    %188 = vector.broadcast %187 : vector<1x128xi1> to vector<8x128xi1>
    %189 = vector.broadcast %cst_85 : f32 to vector<8x128xf32>
    %190 = arith.select %188, %184, %189 : vector<8x128xi1>, vector<8x128xf32>
    %c5_86 = arith.constant 5 : index
    %c0_87 = arith.constant 0 : index
    %c0_88 = arith.constant 0 : index
    %191 = vector.load %arg5[%c5_86, %c0_87, %c0_88] : memref<9x8x8xf32, #tpu.memory_space<vmem>>, vector<1x8x8xf32>
    %192 = vector.shape_cast %191 : vector<1x8x8xf32> to vector<8x8xf32>
    %cst_89 = arith.constant dense<0.000000e+00> : vector<8x128xf32>
    %193 = tpu.matmul %192, %190, %cst_89 {dimension_numbers = #tpu.dot_dimension_numbers<[1], [0], [0], [1], [0, 0, 1, 1], [], []>} : vector<8x8xf32>, vector<8x128xf32>, vector<8x128xf32> -> vector<8x128xf32>
    %194 = arith.addf %183, %193 : vector<8x128xf32>
    %195 = vector.extract_strided_slice %122 {offsets = [0, 32], sizes = [8, 128], strides = [1, 1]} : vector<8x162xf32> to vector<8x128xf32>
    %c0_i32_90 = arith.constant 0 : i32
    %196 = vector.broadcast %c0_i32_90 : i32 to vector<1x128xi32>
    %197 = arith.cmpi sgt, %139, %196 : vector<1x128xi32>
    %cst_91 = arith.constant 0.000000e+00 : f32
    %198 = vector.shape_cast %197 : vector<1x128xi1> to vector<1x128xi1>
    %199 = vector.broadcast %198 : vector<1x128xi1> to vector<8x128xi1>
    %200 = vector.broadcast %cst_91 : f32 to vector<8x128xf32>
    %201 = arith.select %199, %195, %200 : vector<8x128xi1>, vector<8x128xf32>
    %c6_92 = arith.constant 6 : index
    %c0_93 = arith.constant 0 : index
    %c0_94 = arith.constant 0 : index
    %202 = vector.load %arg5[%c6_92, %c0_93, %c0_94] : memref<9x8x8xf32, #tpu.memory_space<vmem>>, vector<1x8x8xf32>
    %203 = vector.shape_cast %202 : vector<1x8x8xf32> to vector<8x8xf32>
    %cst_95 = arith.constant dense<0.000000e+00> : vector<8x128xf32>
    %204 = tpu.matmul %203, %201, %cst_95 {dimension_numbers = #tpu.dot_dimension_numbers<[1], [0], [0], [1], [0, 0, 1, 1], [], []>} : vector<8x8xf32>, vector<8x128xf32>, vector<8x128xf32> -> vector<8x128xf32>
    %205 = arith.addf %194, %204 : vector<8x128xf32>
    %206 = vector.extract_strided_slice %122 {offsets = [0, 33], sizes = [8, 128], strides = [1, 1]} : vector<8x162xf32> to vector<8x128xf32>
    %c7_96 = arith.constant 7 : index
    %c0_97 = arith.constant 0 : index
    %c0_98 = arith.constant 0 : index
    %207 = vector.load %arg5[%c7_96, %c0_97, %c0_98] : memref<9x8x8xf32, #tpu.memory_space<vmem>>, vector<1x8x8xf32>
    %208 = vector.shape_cast %207 : vector<1x8x8xf32> to vector<8x8xf32>
    %cst_99 = arith.constant dense<0.000000e+00> : vector<8x128xf32>
    %209 = tpu.matmul %208, %206, %cst_99 {dimension_numbers = #tpu.dot_dimension_numbers<[1], [0], [0], [1], [0, 0, 1, 1], [], []>} : vector<8x8xf32>, vector<8x128xf32>, vector<8x128xf32> -> vector<8x128xf32>
    %210 = arith.addf %205, %209 : vector<8x128xf32>
    %211 = vector.extract_strided_slice %122 {offsets = [0, 34], sizes = [8, 128], strides = [1, 1]} : vector<8x162xf32> to vector<8x128xf32>
    %c15_i32_100 = arith.constant 15 : i32
    %212 = vector.broadcast %c15_i32_100 : i32 to vector<1x128xi32>
    %213 = arith.cmpi slt, %139, %212 : vector<1x128xi32>
    %cst_101 = arith.constant 0.000000e+00 : f32
    %214 = vector.shape_cast %213 : vector<1x128xi1> to vector<1x128xi1>
    %215 = vector.broadcast %214 : vector<1x128xi1> to vector<8x128xi1>
    %216 = vector.broadcast %cst_101 : f32 to vector<8x128xf32>
    %217 = arith.select %215, %211, %216 : vector<8x128xi1>, vector<8x128xf32>
    %c8_102 = arith.constant 8 : index
    %c0_103 = arith.constant 0 : index
    %c0_104 = arith.constant 0 : index
    %218 = vector.load %arg5[%c8_102, %c0_103, %c0_104] : memref<9x8x8xf32, #tpu.memory_space<vmem>>, vector<1x8x8xf32>
    %219 = vector.shape_cast %218 : vector<1x8x8xf32> to vector<8x8xf32>
    %cst_105 = arith.constant dense<0.000000e+00> : vector<8x128xf32>
    %220 = tpu.matmul %219, %217, %cst_105 {dimension_numbers = #tpu.dot_dimension_numbers<[1], [0], [0], [1], [0, 0, 1, 1], [], []>} : vector<8x8xf32>, vector<8x128xf32>, vector<8x128xf32> -> vector<8x128xf32>
    %221 = arith.addf %210, %220 : vector<8x128xf32>
    %c0_106 = arith.constant 0 : index
    %c0_107 = arith.constant 0 : index
    %222 = vector.load %arg6[%c0_106, %c0_107] : memref<8x1xf32, #tpu.memory_space<vmem>>, vector<8x1xf32>
    %223 = vector.broadcast %222 : vector<8x1xf32> to vector<8x128xf32>
    %224 = arith.addf %221, %223 : vector<8x128xf32>
    %cst_108 = arith.constant 0.000000e+00 : f32
    %225 = vector.broadcast %cst_108 : f32 to vector<8x128xf32>
    %226 = arith.cmpf oge, %224, %225 : vector<8x128xf32>
    %c0_109 = arith.constant 0 : index
    %c0_110 = arith.constant 0 : index
    %227 = vector.load %arg7[%c0_109, %c0_110] : memref<8x1xf32, #tpu.memory_space<vmem>>, vector<8x1xf32>
    %228 = vector.broadcast %227 : vector<8x1xf32> to vector<8x128xf32>
    %229 = arith.mulf %228, %224 : vector<8x128xf32>
    %230 = arith.select %226, %224, %229 : vector<8x128xi1>, vector<8x128xf32>
    %231 = vector.extract_strided_slice %230 {offsets = [0, 0], sizes = [8, 16], strides = [1, 1]} : vector<8x128xf32> to vector<8x16xf32>
    %232 = vector.extract_strided_slice %230 {offsets = [0, 32], sizes = [8, 16], strides = [1, 1]} : vector<8x128xf32> to vector<8x16xf32>
    %233 = vector.extract_strided_slice %230 {offsets = [0, 64], sizes = [8, 16], strides = [1, 1]} : vector<8x128xf32> to vector<8x16xf32>
    %234 = vector.extract_strided_slice %230 {offsets = [0, 96], sizes = [8, 16], strides = [1, 1]} : vector<8x128xf32> to vector<8x16xf32>
    %235 = tpu.concatenate %231, %232, %233, %234 in 1 : vector<8x16xf32>, vector<8x16xf32>, vector<8x16xf32>, vector<8x16xf32> -> vector<8x64xf32>
    %cst_111 = arith.constant 0.000000e+00 : f32
    %236 = vector.broadcast %cst_111 : f32 to vector<8x17xf32>
    %237 = tpu.concatenate %236, %235, %236 in 1 : vector<8x17xf32>, vector<8x64xf32>, vector<8x17xf32> -> vector<8x98xf32>
    %238 = tpu.iota {dimensions = array<i32: 1>} : vector<1x64xi32>
    %c16_i32_112 = arith.constant 16 : i32
    %c0_i32_113 = arith.constant 0 : i32
    %239 = arith.cmpi eq, %c16_i32_112, %c0_i32_113 : i32
    %c1_i32_114 = arith.constant 1 : i32
    %240 = arith.select %239, %c1_i32_114, %c16_i32_112 : i32
    %241 = vector.broadcast %240 : i32 to vector<1x64xi32>
    %242 = arith.remsi %238, %241 : vector<1x64xi32>
    %c0_i32_115 = arith.constant 0 : i32
    %243 = vector.broadcast %c0_i32_115 : i32 to vector<1x64xi32>
    %244 = arith.cmpi ne, %242, %243 : vector<1x64xi32>
    %c0_i32_116 = arith.constant 0 : i32
    %245 = vector.broadcast %c0_i32_116 : i32 to vector<1x64xi32>
    %246 = arith.cmpi slt, %242, %245 : vector<1x64xi32>
    %c0_i32_117 = arith.constant 0 : i32
    %247 = arith.cmpi slt, %240, %c0_i32_117 : i32
    %248 = vector.broadcast %247 : i1 to vector<1x64xi1>
    %249 = vector.broadcast %248 : vector<1x64xi1> to vector<1x64xi1>
    %250 = arith.xori %246, %249 : vector<1x64xi1>
    %251 = arith.andi %250, %244 : vector<1x64xi1>
    %252 = vector.broadcast %240 : i32 to vector<1x64xi32>
    %253 = arith.addi %242, %252 : vector<1x64xi32>
    %254 = arith.select %251, %253, %242 : vector<1x64xi1>, vector<1x64xi32>
    %cst_118 = arith.constant 0.000000e+00 : f32
    %255 = vector.broadcast %cst_118 : f32 to vector<8x64xf32>
    %256 = vector.extract_strided_slice %237 {offsets = [0, 0], sizes = [8, 64], strides = [1, 1]} : vector<8x98xf32> to vector<8x64xf32>
    %c0_i32_119 = arith.constant 0 : i32
    %257 = vector.broadcast %c0_i32_119 : i32 to vector<1x64xi32>
    %258 = arith.cmpi sgt, %254, %257 : vector<1x64xi32>
    %cst_120 = arith.constant 0.000000e+00 : f32
    %259 = vector.shape_cast %258 : vector<1x64xi1> to vector<1x64xi1>
    %260 = vector.broadcast %259 : vector<1x64xi1> to vector<8x64xi1>
    %261 = vector.broadcast %cst_120 : f32 to vector<8x64xf32>
    %262 = arith.select %260, %256, %261 : vector<8x64xi1>, vector<8x64xf32>
    %c0_121 = arith.constant 0 : index
    %c0_122 = arith.constant 0 : index
    %c0_123 = arith.constant 0 : index
    %263 = vector.load %arg8[%c0_121, %c0_122, %c0_123] : memref<9x8x8xf32, #tpu.memory_space<vmem>>, vector<1x8x8xf32>
    %264 = vector.shape_cast %263 : vector<1x8x8xf32> to vector<8x8xf32>
    %cst_124 = arith.constant dense<0.000000e+00> : vector<8x64xf32>
    %265 = tpu.matmul %264, %262, %cst_124 {dimension_numbers = #tpu.dot_dimension_numbers<[1], [0], [0], [1], [0, 0, 1, 1], [], []>} : vector<8x8xf32>, vector<8x64xf32>, vector<8x64xf32> -> vector<8x64xf32>
    %266 = arith.addf %255, %265 : vector<8x64xf32>
    %267 = vector.extract_strided_slice %237 {offsets = [0, 1], sizes = [8, 64], strides = [1, 1]} : vector<8x98xf32> to vector<8x64xf32>
    %c1_125 = arith.constant 1 : index
    %c0_126 = arith.constant 0 : index
    %c0_127 = arith.constant 0 : index
    %268 = vector.load %arg8[%c1_125, %c0_126, %c0_127] : memref<9x8x8xf32, #tpu.memory_space<vmem>>, vector<1x8x8xf32>
    %269 = vector.shape_cast %268 : vector<1x8x8xf32> to vector<8x8xf32>
    %cst_128 = arith.constant dense<0.000000e+00> : vector<8x64xf32>
    %270 = tpu.matmul %269, %267, %cst_128 {dimension_numbers = #tpu.dot_dimension_numbers<[1], [0], [0], [1], [0, 0, 1, 1], [], []>} : vector<8x8xf32>, vector<8x64xf32>, vector<8x64xf32> -> vector<8x64xf32>
    %271 = arith.addf %266, %270 : vector<8x64xf32>
    %272 = vector.extract_strided_slice %237 {offsets = [0, 2], sizes = [8, 64], strides = [1, 1]} : vector<8x98xf32> to vector<8x64xf32>
    %c15_i32_129 = arith.constant 15 : i32
    %273 = vector.broadcast %c15_i32_129 : i32 to vector<1x64xi32>
    %274 = arith.cmpi slt, %254, %273 : vector<1x64xi32>
    %cst_130 = arith.constant 0.000000e+00 : f32
    %275 = vector.shape_cast %274 : vector<1x64xi1> to vector<1x64xi1>
    %276 = vector.broadcast %275 : vector<1x64xi1> to vector<8x64xi1>
    %277 = vector.broadcast %cst_130 : f32 to vector<8x64xf32>
    %278 = arith.select %276, %272, %277 : vector<8x64xi1>, vector<8x64xf32>
    %c2_131 = arith.constant 2 : index
    %c0_132 = arith.constant 0 : index
    %c0_133 = arith.constant 0 : index
    %279 = vector.load %arg8[%c2_131, %c0_132, %c0_133] : memref<9x8x8xf32, #tpu.memory_space<vmem>>, vector<1x8x8xf32>
    %280 = vector.shape_cast %279 : vector<1x8x8xf32> to vector<8x8xf32>
    %cst_134 = arith.constant dense<0.000000e+00> : vector<8x64xf32>
    %281 = tpu.matmul %280, %278, %cst_134 {dimension_numbers = #tpu.dot_dimension_numbers<[1], [0], [0], [1], [0, 0, 1, 1], [], []>} : vector<8x8xf32>, vector<8x64xf32>, vector<8x64xf32> -> vector<8x64xf32>
    %282 = arith.addf %271, %281 : vector<8x64xf32>
    %283 = vector.extract_strided_slice %237 {offsets = [0, 16], sizes = [8, 64], strides = [1, 1]} : vector<8x98xf32> to vector<8x64xf32>
    %c0_i32_135 = arith.constant 0 : i32
    %284 = vector.broadcast %c0_i32_135 : i32 to vector<1x64xi32>
    %285 = arith.cmpi sgt, %254, %284 : vector<1x64xi32>
    %cst_136 = arith.constant 0.000000e+00 : f32
    %286 = vector.shape_cast %285 : vector<1x64xi1> to vector<1x64xi1>
    %287 = vector.broadcast %286 : vector<1x64xi1> to vector<8x64xi1>
    %288 = vector.broadcast %cst_136 : f32 to vector<8x64xf32>
    %289 = arith.select %287, %283, %288 : vector<8x64xi1>, vector<8x64xf32>
    %c3_137 = arith.constant 3 : index
    %c0_138 = arith.constant 0 : index
    %c0_139 = arith.constant 0 : index
    %290 = vector.load %arg8[%c3_137, %c0_138, %c0_139] : memref<9x8x8xf32, #tpu.memory_space<vmem>>, vector<1x8x8xf32>
    %291 = vector.shape_cast %290 : vector<1x8x8xf32> to vector<8x8xf32>
    %cst_140 = arith.constant dense<0.000000e+00> : vector<8x64xf32>
    %292 = tpu.matmul %291, %289, %cst_140 {dimension_numbers = #tpu.dot_dimension_numbers<[1], [0], [0], [1], [0, 0, 1, 1], [], []>} : vector<8x8xf32>, vector<8x64xf32>, vector<8x64xf32> -> vector<8x64xf32>
    %293 = arith.addf %282, %292 : vector<8x64xf32>
    %294 = vector.extract_strided_slice %237 {offsets = [0, 17], sizes = [8, 64], strides = [1, 1]} : vector<8x98xf32> to vector<8x64xf32>
    %c4_141 = arith.constant 4 : index
    %c0_142 = arith.constant 0 : index
    %c0_143 = arith.constant 0 : index
    %295 = vector.load %arg8[%c4_141, %c0_142, %c0_143] : memref<9x8x8xf32, #tpu.memory_space<vmem>>, vector<1x8x8xf32>
    %296 = vector.shape_cast %295 : vector<1x8x8xf32> to vector<8x8xf32>
    %cst_144 = arith.constant dense<0.000000e+00> : vector<8x64xf32>
    %297 = tpu.matmul %296, %294, %cst_144 {dimension_numbers = #tpu.dot_dimension_numbers<[1], [0], [0], [1], [0, 0, 1, 1], [], []>} : vector<8x8xf32>, vector<8x64xf32>, vector<8x64xf32> -> vector<8x64xf32>
    %298 = arith.addf %293, %297 : vector<8x64xf32>
    %299 = vector.extract_strided_slice %237 {offsets = [0, 18], sizes = [8, 64], strides = [1, 1]} : vector<8x98xf32> to vector<8x64xf32>
    %c15_i32_145 = arith.constant 15 : i32
    %300 = vector.broadcast %c15_i32_145 : i32 to vector<1x64xi32>
    %301 = arith.cmpi slt, %254, %300 : vector<1x64xi32>
    %cst_146 = arith.constant 0.000000e+00 : f32
    %302 = vector.shape_cast %301 : vector<1x64xi1> to vector<1x64xi1>
    %303 = vector.broadcast %302 : vector<1x64xi1> to vector<8x64xi1>
    %304 = vector.broadcast %cst_146 : f32 to vector<8x64xf32>
    %305 = arith.select %303, %299, %304 : vector<8x64xi1>, vector<8x64xf32>
    %c5_147 = arith.constant 5 : index
    %c0_148 = arith.constant 0 : index
    %c0_149 = arith.constant 0 : index
    %306 = vector.load %arg8[%c5_147, %c0_148, %c0_149] : memref<9x8x8xf32, #tpu.memory_space<vmem>>, vector<1x8x8xf32>
    %307 = vector.shape_cast %306 : vector<1x8x8xf32> to vector<8x8xf32>
    %cst_150 = arith.constant dense<0.000000e+00> : vector<8x64xf32>
    %308 = tpu.matmul %307, %305, %cst_150 {dimension_numbers = #tpu.dot_dimension_numbers<[1], [0], [0], [1], [0, 0, 1, 1], [], []>} : vector<8x8xf32>, vector<8x64xf32>, vector<8x64xf32> -> vector<8x64xf32>
    %309 = arith.addf %298, %308 : vector<8x64xf32>
    %310 = vector.extract_strided_slice %237 {offsets = [0, 32], sizes = [8, 64], strides = [1, 1]} : vector<8x98xf32> to vector<8x64xf32>
    %c0_i32_151 = arith.constant 0 : i32
    %311 = vector.broadcast %c0_i32_151 : i32 to vector<1x64xi32>
    %312 = arith.cmpi sgt, %254, %311 : vector<1x64xi32>
    %cst_152 = arith.constant 0.000000e+00 : f32
    %313 = vector.shape_cast %312 : vector<1x64xi1> to vector<1x64xi1>
    %314 = vector.broadcast %313 : vector<1x64xi1> to vector<8x64xi1>
    %315 = vector.broadcast %cst_152 : f32 to vector<8x64xf32>
    %316 = arith.select %314, %310, %315 : vector<8x64xi1>, vector<8x64xf32>
    %c6_153 = arith.constant 6 : index
    %c0_154 = arith.constant 0 : index
    %c0_155 = arith.constant 0 : index
    %317 = vector.load %arg8[%c6_153, %c0_154, %c0_155] : memref<9x8x8xf32, #tpu.memory_space<vmem>>, vector<1x8x8xf32>
    %318 = vector.shape_cast %317 : vector<1x8x8xf32> to vector<8x8xf32>
    %cst_156 = arith.constant dense<0.000000e+00> : vector<8x64xf32>
    %319 = tpu.matmul %318, %316, %cst_156 {dimension_numbers = #tpu.dot_dimension_numbers<[1], [0], [0], [1], [0, 0, 1, 1], [], []>} : vector<8x8xf32>, vector<8x64xf32>, vector<8x64xf32> -> vector<8x64xf32>
    %320 = arith.addf %309, %319 : vector<8x64xf32>
    %321 = vector.extract_strided_slice %237 {offsets = [0, 33], sizes = [8, 64], strides = [1, 1]} : vector<8x98xf32> to vector<8x64xf32>
    %c7_157 = arith.constant 7 : index
    %c0_158 = arith.constant 0 : index
    %c0_159 = arith.constant 0 : index
    %322 = vector.load %arg8[%c7_157, %c0_158, %c0_159] : memref<9x8x8xf32, #tpu.memory_space<vmem>>, vector<1x8x8xf32>
    %323 = vector.shape_cast %322 : vector<1x8x8xf32> to vector<8x8xf32>
    %cst_160 = arith.constant dense<0.000000e+00> : vector<8x64xf32>
    %324 = tpu.matmul %323, %321, %cst_160 {dimension_numbers = #tpu.dot_dimension_numbers<[1], [0], [0], [1], [0, 0, 1, 1], [], []>} : vector<8x8xf32>, vector<8x64xf32>, vector<8x64xf32> -> vector<8x64xf32>
    %325 = arith.addf %320, %324 : vector<8x64xf32>
    %326 = vector.extract_strided_slice %237 {offsets = [0, 34], sizes = [8, 64], strides = [1, 1]} : vector<8x98xf32> to vector<8x64xf32>
    %c15_i32_161 = arith.constant 15 : i32
    %327 = vector.broadcast %c15_i32_161 : i32 to vector<1x64xi32>
    %328 = arith.cmpi slt, %254, %327 : vector<1x64xi32>
    %cst_162 = arith.constant 0.000000e+00 : f32
    %329 = vector.shape_cast %328 : vector<1x64xi1> to vector<1x64xi1>
    %330 = vector.broadcast %329 : vector<1x64xi1> to vector<8x64xi1>
    %331 = vector.broadcast %cst_162 : f32 to vector<8x64xf32>
    %332 = arith.select %330, %326, %331 : vector<8x64xi1>, vector<8x64xf32>
    %c8_163 = arith.constant 8 : index
    %c0_164 = arith.constant 0 : index
    %c0_165 = arith.constant 0 : index
    %333 = vector.load %arg8[%c8_163, %c0_164, %c0_165] : memref<9x8x8xf32, #tpu.memory_space<vmem>>, vector<1x8x8xf32>
    %334 = vector.shape_cast %333 : vector<1x8x8xf32> to vector<8x8xf32>
    %cst_166 = arith.constant dense<0.000000e+00> : vector<8x64xf32>
    %335 = tpu.matmul %334, %332, %cst_166 {dimension_numbers = #tpu.dot_dimension_numbers<[1], [0], [0], [1], [0, 0, 1, 1], [], []>} : vector<8x8xf32>, vector<8x64xf32>, vector<8x64xf32> -> vector<8x64xf32>
    %336 = arith.addf %325, %335 : vector<8x64xf32>
    %c0_167 = arith.constant 0 : index
    %c0_168 = arith.constant 0 : index
    %337 = vector.load %arg9[%c0_167, %c0_168] : memref<8x1xf32, #tpu.memory_space<vmem>>, vector<8x1xf32>
    %338 = vector.broadcast %337 : vector<8x1xf32> to vector<8x64xf32>
    %339 = arith.addf %336, %338 : vector<8x64xf32>
    %cst_169 = arith.constant 0.000000e+00 : f32
    %340 = vector.broadcast %cst_169 : f32 to vector<8x64xf32>
    %341 = arith.cmpf oge, %339, %340 : vector<8x64xf32>
    %c0_170 = arith.constant 0 : index
    %c0_171 = arith.constant 0 : index
    %342 = vector.load %arg10[%c0_170, %c0_171] : memref<8x1xf32, #tpu.memory_space<vmem>>, vector<8x1xf32>
    %343 = vector.broadcast %342 : vector<8x1xf32> to vector<8x64xf32>
    %344 = arith.mulf %343, %339 : vector<8x64xf32>
    %345 = arith.select %341, %339, %344 : vector<8x64xi1>, vector<8x64xf32>
    %346 = vector.extract_strided_slice %345 {offsets = [0, 0], sizes = [8, 16], strides = [1, 1]} : vector<8x64xf32> to vector<8x16xf32>
    %347 = vector.extract_strided_slice %345 {offsets = [0, 32], sizes = [8, 16], strides = [1, 1]} : vector<8x64xf32> to vector<8x16xf32>
    %348 = tpu.concatenate %346, %347 in 1 : vector<8x16xf32>, vector<8x16xf32> -> vector<8x32xf32>
    %349 = vector.extract_strided_slice %348 {offsets = [0, 0], sizes = [8, 16], strides = [1, 1]} : vector<8x32xf32> to vector<8x16xf32>
    %350 = vector.extract_strided_slice %348 {offsets = [0, 16], sizes = [8, 16], strides = [1, 1]} : vector<8x32xf32> to vector<8x16xf32>
    %351 = tpu.concatenate %349, %350 in 0 : vector<8x16xf32>, vector<8x16xf32> -> vector<16x16xf32>
    %c0_172 = arith.constant 0 : index
    %c0_173 = arith.constant 0 : index
    %352 = vector.load %arg11[%c0_172, %c0_173] : memref<16x32xf32, #tpu.memory_space<vmem>>, vector<16x32xf32>
    %cst_174 = arith.constant dense<0.000000e+00> : vector<16x32xf32>
    %353 = tpu.matmul %351, %352, %cst_174 {dimension_numbers = #tpu.dot_dimension_numbers<[1], [0], [0], [1], [0, 0, 1, 1], [], []>} : vector<16x16xf32>, vector<16x32xf32>, vector<16x32xf32> -> vector<16x32xf32>
    %354 = vector.extract_strided_slice %353 {offsets = [0, 0], sizes = [8, 32], strides = [1, 1]} : vector<16x32xf32> to vector<8x32xf32>
    %355 = vector.extract_strided_slice %353 {offsets = [8, 0], sizes = [8, 32], strides = [1, 1]} : vector<16x32xf32> to vector<8x32xf32>
    %356 = tpu.concatenate %354, %355 in 1 : vector<8x32xf32>, vector<8x32xf32> -> vector<8x64xf32>
    %357 = vector.extract_strided_slice %356 {offsets = [0, 0], sizes = [4, 64], strides = [1, 1]} : vector<8x64xf32> to vector<4x64xf32>
    %c0_175 = arith.constant 0 : index
    %c0_176 = arith.constant 0 : index
    %c0_177 = arith.constant 0 : index
    %358 = vector.load %arg12[%c0_175, %c0_176, %c0_177] : memref<1x4x64xf32, #tpu.memory_space<vmem>>, vector<1x4x64xf32>
    %359 = vector.shape_cast %358 : vector<1x4x64xf32> to vector<4x64xf32>
    %360 = vector.shape_cast %357 : vector<4x64xf32> to vector<1x4x64xf32>
    tpu.vector_store %arg12[%c0_175, %c0_176, %c0_177], %360 {strides = array<i32>} : memref<1x4x64xf32, #tpu.memory_space<vmem>>, vector<1x4x64xf32>,
    return
  }
  func.func @transform_0(%arg0: i32) -> (i32, i32, i32) {
    %c0_i32 = arith.constant 0 : i32
    %c0_i32_0 = arith.constant 0 : i32
    %c0_i32_1 = arith.constant 0 : i32
    return %arg0, %c0_i32, %c0_i32_0 : i32, i32, i32
  }
  func.func @transform_1(%arg0: i32) -> (i32, i32, i32) {
    %c0_i32 = arith.constant 0 : i32
    %c0_i32_0 = arith.constant 0 : i32
    %c0_i32_1 = arith.constant 0 : i32
    %c0_i32_2 = arith.constant 0 : i32
    return %c0_i32, %c0_i32_0, %c0_i32_1 : i32, i32, i32
  }
  func.func @transform_2(%arg0: i32) -> (i32, i32) {
    %c0_i32 = arith.constant 0 : i32
    %c0_i32_0 = arith.constant 0 : i32
    %c0_i32_1 = arith.constant 0 : i32
    return %c0_i32, %c0_i32_0 : i32, i32
  }
  func.func @transform_3(%arg0: i32) -> (i32, i32) {
    %c0_i32 = arith.constant 0 : i32
    %c0_i32_0 = arith.constant 0 : i32
    %c0_i32_1 = arith.constant 0 : i32
    return %c0_i32, %c0_i32_0 : i32, i32
  }
  func.func @transform_4(%arg0: i32) -> (i32, i32, i32) {
    %c0_i32 = arith.constant 0 : i32
    %c0_i32_0 = arith.constant 0 : i32
    %c0_i32_1 = arith.constant 0 : i32
    %c0_i32_2 = arith.constant 0 : i32
    return %c0_i32, %c0_i32_0, %c0_i32_1 : i32, i32, i32
  }
  func.func @transform_5(%arg0: i32) -> (i32, i32) {
    %c0_i32 = arith.constant 0 : i32
    %c0_i32_0 = arith.constant 0 : i32
    %c0_i32_1 = arith.constant 0 : i32
    return %c0_i32, %c0_i32_0 : i32, i32
  }
  func.func @transform_6(%arg0: i32) -> (i32, i32) {
    %c0_i32 = arith.constant 0 : i32
    %c0_i32_0 = arith.constant 0 : i32
    %c0_i32_1 = arith.constant 0 : i32
    return %c0_i32, %c0_i32_0 : i32, i32
  }
  func.func @transform_7(%arg0: i32) -> (i32, i32, i32) {
    %c0_i32 = arith.constant 0 : i32
    %c0_i32_0 = arith.constant 0 : i32
    %c0_i32_1 = arith.constant 0 : i32
    %c0_i32_2 = arith.constant 0 : i32
    return %c0_i32, %c0_i32_0, %c0_i32_1 : i32, i32, i32
  }
  func.func @transform_8(%arg0: i32) -> (i32, i32) {
    %c0_i32 = arith.constant 0 : i32
    %c0_i32_0 = arith.constant 0 : i32
    %c0_i32_1 = arith.constant 0 : i32
    return %c0_i32, %c0_i32_0 : i32, i32
  }
  func.func @transform_9(%arg0: i32) -> (i32, i32) {
    %c0_i32 = arith.constant 0 : i32
    %c0_i32_0 = arith.constant 0 : i32
    %c0_i32_1 = arith.constant 0 : i32
    return %c0_i32, %c0_i32_0 : i32, i32
  }
  func.func @transform_10(%arg0: i32) -> (i32, i32) {
    %c0_i32 = arith.constant 0 : i32
    %c0_i32_0 = arith.constant 0 : i32
    %c0_i32_1 = arith.constant 0 : i32
    return %c0_i32, %c0_i32_0 : i32, i32
  }
  func.func @transform_11(%arg0: i32) -> (i32, i32, i32) {
    %c0_i32 = arith.constant 0 : i32
    %c0_i32_0 = arith.constant 0 : i32
    %c0_i32_1 = arith.constant 0 : i32
    return %arg0, %c0_i32, %c0_i32_0 : i32, i32, i32
  }
}

</mosaic_0001>

<llo_original>
// kernel: tpu_custom_call.1
$region0: #{tpu_custom_call.1}
  #allocation0 [shape = 'u32[]', space=smem, size = 0x4, offset = 0x4, fixed_abs, tag = 'smem constant byte address 0x4 - core index']
  #allocation1 [shape = 'u32[72,128]{1,0:T(1,128)}', space=vmem, size = 0x9000, scoped, tag = 'internal scratch']
  %s0 = inlined_call_operand.vmem [shape: f32[2,8,256], index: 0, kind: input, shape index: {}]
  %s1 = inlined_call_operand.vmem [shape: f32[9,8,8], index: 1, kind: input, shape index: {}]
  %s2 = inlined_call_operand.vmem [shape: f32[8,1], index: 2, kind: input, shape index: {}]
  %s3 = inlined_call_operand.vmem [shape: f32[8,1], index: 3, kind: input, shape index: {}]
  %s4 = inlined_call_operand.vmem [shape: f32[9,8,8], index: 4, kind: input, shape index: {}]
  %s5 = inlined_call_operand.vmem [shape: f32[8,1], index: 5, kind: input, shape index: {}]
  %s6 = inlined_call_operand.vmem [shape: f32[8,1], index: 6, kind: input, shape index: {}]
  %s7 = inlined_call_operand.vmem [shape: f32[9,8,8], index: 7, kind: input, shape index: {}]
  %s8 = inlined_call_operand.vmem [shape: f32[8,1], index: 8, kind: input, shape index: {}]
  %s9 = inlined_call_operand.vmem [shape: f32[8,1], index: 9, kind: input, shape index: {}]
  %s10 = inlined_call_operand.vmem [shape: f32[16,32], index: 10, kind: input, shape index: {}]
  %s11 = inlined_call_operand.hbm [shape: f32[2,4,64], index: 11, kind: output, shape index: {}]
  %s12 = sld [smem:[#allocation0]]
  $region77: #{tpu_custom_call.1} parent=0
    _
  %s14 = ssub.s32 1, %s12
  %s15 = scalar_select 0, %s14, %s12
  $region1: #{tpu_custom_call.1} parent=0
    #allocation2 [shape = 'u8[4096]{0}', space=vmem, size = 0x1000, scoped, tag = 'output window, operand 0']
    #allocation3 [shape = 's32[2]{0}', space=sflag, size = 0x8, scoped, tag = 'scoped memory for tpu_custom_call.1']
    %16 = vsyncpa [#allocation3], 0
    %s17 = scalar_lea.sflag [#allocation3], 1
    %18 = vsyncpa %s17, 0
    loop: start=0, step=1, limit=4
    $region2: #{tpu_custom_call.1} parent=1 // loop_pre_header
      _
    $region3: #{tpu_custom_call.1} parent=1 // loop_header
      %s20 = sphi 0, %s24
      %p21 = scmp.ge.s32.totalorder %s20, 4
      %s30 = sphi 0, %s32
      %s33 = sphi 0, %s30
      %s34 = sphi 0, %s33
      %s50 = sphi 0, %s34
      %s54 = sphi 0, %s54
      %s56 = sphi 0, %s54
      %s57 = sphi 0, %s56
      %s71 = sphi 0, %s57
      %s75 = sphi 0, %s75
      %s77 = sphi 0, %s75
      %s78 = sphi 0, %s77
      %s92 = sphi 0, %s78
      %s96 = sphi 0, %s96
      %s98 = sphi 0, %s96
      %s99 = sphi 0, %s98
      %s113 = sphi 0, %s99
      %s117 = sphi 0, %s117
      %s119 = sphi 0, %s117
      %s120 = sphi 0, %s119
      %s134 = sphi 0, %s120
      %s138 = sphi 0, %s138
      %s140 = sphi 0, %s138
      %s141 = sphi 0, %s140
      %s155 = sphi 0, %s141
      %s159 = sphi 0, %s159
      %s161 = sphi 0, %s159
      %s162 = sphi 0, %s161
      %s176 = sphi 0, %s162
      %s180 = sphi 0, %s180
      %s182 = sphi 0, %s180
      %s183 = sphi 0, %s182
      %s197 = sphi 0, %s183
      %s201 = sphi 0, %s201
      %s203 = sphi 0, %s201
      %s204 = sphi 0, %s203
      %s218 = sphi 0, %s204
      %s222 = sphi 0, %s222
      %s224 = sphi 0, %s222
      %s225 = sphi 0, %s224
      %s239 = sphi 0, %s225
      %s243 = sphi 0, %s243
      %s245 = sphi 0, %s243
      %s246 = sphi 0, %s245
      %s260 = sphi 0, %s246
      %s266 = sphi 0, %s268
      %s269 = sphi 0, %s266
      %s270 = sphi 0, %s269
      %s286 = sphi 0, %s270
    $region4: #{tpu_custom_call.1} parent=1 // loop_header_branch
      %23 = sbr.rel (%p21) target = $region8
    $region5: #{tpu_custom_call.1} parent=1 // loop_body
      %s25 = ssub.s32 %s20, 1
      %s26 = ssub.s32 %s20, 2
      %s27 = sadd.s32 %s20, 1
      %s28 = ssub.s32 %s20, %s27
      %p29 = scmp.eq.s32.totalorder %s28, 0
      %s31 = sadd.s32 %s30, 1
      %s32 = scalar_select %p29, %s30, %s31
      %p35 = pneg %p29
      %p36 = scmp.eq.s32.totalorder %s20, 1
      %p37 = por %p35, %p36
      %p38 = scmp.ne.s32.totalorder %s30, %s33
      %p39 = scmp.eq.s32.totalorder %s20, 0
      %p40 = por %p38, %p39
      %p41 = scmp.ne.s32.totalorder %s30, %s33
      %p42 = scmp.eq.s32.totalorder %s25, 1
      %p43 = por %p41, %p42
      %p44 = scmp.ne.s32.totalorder %s33, %s34
      %p45 = scmp.eq.s32.totalorder %s25, 0
      %p46 = por %p44, %p45
      %p47 = scmp.ne.s32.totalorder %s33, %s34
      %p48 = scmp.eq.s32.totalorder %s26, 1
      %p49 = por %p47, %p48
      %p51 = scmp.ne.s32.totalorder %s34, %s50
      %p52 = scmp.eq.s32.totalorder %s26, 0
      %p53 = por %p51, %p52
      %s55 = sadd.s32 %s54, 1
      %p58 = scmp.eq.s32.totalorder %s20, 1
      %p59 = scmp.ne.s32.totalorder %s54, %s56
      %p60 = scmp.eq.s32.totalorder %s20, 0
      %p61 = por %p59, %p60
      %p62 = scmp.ne.s32.totalorder %s54, %s56
      %p63 = scmp.eq.s32.totalorder %s25, 1
      %p64 = por %p62, %p63
      %p65 = scmp.ne.s32.totalorder %s56, %s57
      %p66 = scmp.eq.s32.totalorder %s25, 0
      %p67 = por %p65, %p66
      %p68 = scmp.ne.s32.totalorder %s56, %s57
      %p69 = scmp.eq.s32.totalorder %s26, 1
      %p70 = por %p68, %p69
      %p72 = scmp.ne.s32.totalorder %s57, %s71
      %p73 = scmp.eq.s32.totalorder %s26, 0
      %p74 = por %p72, %p73
      %s76 = sadd.s32 %s75, 1
      %p79 = scmp.eq.s32.totalorder %s20, 1
      %p80 = scmp.ne.s32.totalorder %s75, %s77
      %p81 = scmp.eq.s32.totalorder %s20, 0
      %p82 = por %p80, %p81
      %p83 = scmp.ne.s32.totalorder %s75, %s77
      %p84 = scmp.eq.s32.totalorder %s25, 1
      %p85 = por %p83, %p84
      %p86 = scmp.ne.s32.totalorder %s77, %s78
      %p87 = scmp.eq.s32.totalorder %s25, 0
      %p88 = por %p86, %p87
      %p89 = scmp.ne.s32.totalorder %s77, %s78
      %p90 = scmp.eq.s32.totalorder %s26, 1
      %p91 = por %p89, %p90
      %p93 = scmp.ne.s32.totalorder %s78, %s92
      %p94 = scmp.eq.s32.totalorder %s26, 0
      %p95 = por %p93, %p94
      %s97 = sadd.s32 %s96, 1
      %p100 = scmp.eq.s32.totalorder %s20, 1
      %p101 = scmp.ne.s32.totalorder %s96, %s98
      %p102 = scmp.eq.s32.totalorder %s20, 0
      %p103 = por %p101, %p102
      %p104 = scmp.ne.s32.totalorder %s96, %s98
      %p105 = scmp.eq.s32.totalorder %s25, 1
      %p106 = por %p104, %p105
      %p107 = scmp.ne.s32.totalorder %s98, %s99
      %p108 = scmp.eq.s32.totalorder %s25, 0
      %p109 = por %p107, %p108
      %p110 = scmp.ne.s32.totalorder %s98, %s99
      %p111 = scmp.eq.s32.totalorder %s26, 1
      %p112 = por %p110, %p111
      %p114 = scmp.ne.s32.totalorder %s99, %s113
      %p115 = scmp.eq.s32.totalorder %s26, 0
      %p116 = por %p114, %p115
      %s118 = sadd.s32 %s117, 1
      %p121 = scmp.eq.s32.totalorder %s20, 1
      %p122 = scmp.ne.s32.totalorder %s117, %s119
      %p123 = scmp.eq.s32.totalorder %s20, 0
      %p124 = por %p122, %p123
      %p125 = scmp.ne.s32.totalorder %s117, %s119
      %p126 = scmp.eq.s32.totalorder %s25, 1
      %p127 = por %p125, %p126
      %p128 = scmp.ne.s32.totalorder %s119, %s120
      %p129 = scmp.eq.s32.totalorder %s25, 0
      %p130 = por %p128, %p129
      %p131 = scmp.ne.s32.totalorder %s119, %s120
      %p132 = scmp.eq.s32.totalorder %s26, 1
      %p133 = por %p131, %p132
      %p135 = scmp.ne.s32.totalorder %s120, %s134
      %p136 = scmp.eq.s32.totalorder %s26, 0
      %p137 = por %p135, %p136
      %s139 = sadd.s32 %s138, 1
      %p142 = scmp.eq.s32.totalorder %s20, 1
      %p143 = scmp.ne.s32.totalorder %s138, %s140
      %p144 = scmp.eq.s32.totalorder %s20, 0
      %p145 = por %p143, %p144
      %p146 = scmp.ne.s32.totalorder %s138, %s140
      %p147 = scmp.eq.s32.totalorder %s25, 1
      %p148 = por %p146, %p147
      %p149 = scmp.ne.s32.totalorder %s140, %s141
      %p150 = scmp.eq.s32.totalorder %s25, 0
      %p151 = por %p149, %p150
      %p152 = scmp.ne.s32.totalorder %s140, %s141
      %p153 = scmp.eq.s32.totalorder %s26, 1
      %p154 = por %p152, %p153
      %p156 = scmp.ne.s32.totalorder %s141, %s155
      %p157 = scmp.eq.s32.totalorder %s26, 0
      %p158 = por %p156, %p157
      %s160 = sadd.s32 %s159, 1
      %p163 = scmp.eq.s32.totalorder %s20, 1
      %p164 = scmp.ne.s32.totalorder %s159, %s161
      %p165 = scmp.eq.s32.totalorder %s20, 0
      %p166 = por %p164, %p165
      %p167 = scmp.ne.s32.totalorder %s159, %s161
      %p168 = scmp.eq.s32.totalorder %s25, 1
      %p169 = por %p167, %p168
      %p170 = scmp.ne.s32.totalorder %s161, %s162
      %p171 = scmp.eq.s32.totalorder %s25, 0
      %p172 = por %p170, %p171
      %p173 = scmp.ne.s32.totalorder %s161, %s162
      %p174 = scmp.eq.s32.totalorder %s26, 1
      %p175 = por %p173, %p174
      %p177 = scmp.ne.s32.totalorder %s162, %s176
      %p178 = scmp.eq.s32.totalorder %s26, 0
      %p179 = por %p177, %p178
      %s181 = sadd.s32 %s180, 1
      %p184 = scmp.eq.s32.totalorder %s20, 1
      %p185 = scmp.ne.s32.totalorder %s180, %s182
      %p186 = scmp.eq.s32.totalorder %s20, 0
      %p187 = por %p185, %p186
      %p188 = scmp.ne.s32.totalorder %s180, %s182
      %p189 = scmp.eq.s32.totalorder %s25, 1
      %p190 = por %p188, %p189
      %p191 = scmp.ne.s32.totalorder %s182, %s183
      %p192 = scmp.eq.s32.totalorder %s25, 0
      %p193 = por %p191, %p192
      %p194 = scmp.ne.s32.totalorder %s182, %s183
      %p195 = scmp.eq.s32.totalorder %s26, 1
      %p196 = por %p194, %p195
      %p198 = scmp.ne.s32.totalorder %s183, %s197
      %p199 = scmp.eq.s32.totalorder %s26, 0
      %p200 = por %p198, %p199
      %s202 = sadd.s32 %s201, 1
      %p205 = scmp.eq.s32.totalorder %s20, 1
      %p206 = scmp.ne.s32.totalorder %s201, %s203
      %p207 = scmp.eq.s32.totalorder %s20, 0
      %p208 = por %p206, %p207
      %p209 = scmp.ne.s32.totalorder %s201, %s203
      %p210 = scmp.eq.s32.totalorder %s25, 1
      %p211 = por %p209, %p210
      %p212 = scmp.ne.s32.totalorder %s203, %s204
      %p213 = scmp.eq.s32.totalorder %s25, 0
      %p214 = por %p212, %p213
      %p215 = scmp.ne.s32.totalorder %s203, %s204
      %p216 = scmp.eq.s32.totalorder %s26, 1
      %p217 = por %p215, %p216
      %p219 = scmp.ne.s32.totalorder %s204, %s218
      %p220 = scmp.eq.s32.totalorder %s26, 0
      %p221 = por %p219, %p220
      %s223 = sadd.s32 %s222, 1
      %p226 = scmp.eq.s32.totalorder %s20, 1
      %p227 = scmp.ne.s32.totalorder %s222, %s224
      %p228 = scmp.eq.s32.totalorder %s20, 0
      %p229 = por %p227, %p228
      %p230 = scmp.ne.s32.totalorder %s222, %s224
      %p231 = scmp.eq.s32.totalorder %s25, 1
      %p232 = por %p230, %p231
      %p233 = scmp.ne.s32.totalorder %s224, %s225
      %p234 = scmp.eq.s32.totalorder %s25, 0
      %p235 = por %p233, %p234
      %p236 = scmp.ne.s32.totalorder %s224, %s225
      %p237 = scmp.eq.s32.totalorder %s26, 1
      %p238 = por %p236, %p237
      %p240 = scmp.ne.s32.totalorder %s225, %s239
      %p241 = scmp.eq.s32.totalorder %s26, 0
      %p242 = por %p240, %p241
      %s244 = sadd.s32 %s243, 1
      %p247 = scmp.eq.s32.totalorder %s20, 1
      %p248 = scmp.ne.s32.totalorder %s243, %s245
      %p249 = scmp.eq.s32.totalorder %s20, 0
      %p250 = por %p248, %p249
      %p251 = scmp.ne.s32.totalorder %s243, %s245
      %p252 = scmp.eq.s32.totalorder %s25, 1
      %p253 = por %p251, %p252
      %p254 = scmp.ne.s32.totalorder %s245, %s246
      %p255 = scmp.eq.s32.totalorder %s25, 0
      %p256 = por %p254, %p255
      %p257 = scmp.ne.s32.totalorder %s245, %s246
      %p258 = scmp.eq.s32.totalorder %s26, 1
      %p259 = por %p257, %p258
      %p261 = scmp.ne.s32.totalorder %s246, %s260
      %p262 = scmp.eq.s32.totalorder %s26, 0
      %p263 = por %p261, %p262
      %s264 = ssub.s32 %s20, %s27
      %p265 = scmp.eq.s32.totalorder %s264, 0
      %s267 = sadd.s32 %s266, 1
      %s268 = scalar_select %p265, %s266, %s267
      %p271 = pneg %p265
      %p272 = scmp.eq.s32.totalorder %s20, 1
      %p273 = por %p271, %p272
      %p274 = scmp.ne.s32.totalorder %s266, %s269
      %p275 = scmp.eq.s32.totalorder %s20, 0
      %p276 = por %p274, %p275
      %p277 = scmp.ne.s32.totalorder %s266, %s269
      %p278 = scmp.eq.s32.totalorder %s25, 1
      %p279 = por %p277, %p278
      %p280 = scmp.ne.s32.totalorder %s269, %s270
      %p281 = scmp.eq.s32.totalorder %s25, 0
      %p282 = por %p280, %p281
      %p283 = scmp.ne.s32.totalorder %s269, %s270
      %p284 = scmp.eq.s32.totalorder %s26, 1
      %p285 = por %p283, %p284
      %p287 = scmp.ne.s32.totalorder %s270, %s286
      %p288 = scmp.eq.s32.totalorder %s26, 0
      %p289 = por %p287, %p288
      %p290 = scmp.le.s32.totalorder 1, %s20
      %p291 = scmp.lt.s32.totalorder %s20, 3
      %p292 = pnand %p290, %p291
      %p293 = pneg %p292
      // Predicated region
      $region9: #{tpu_custom_call.1} parent=5 // pred_check
        _
      $region10: #{tpu_custom_call.1} parent=5 // pred_check_branch
        %295 = sbr.rel (%p292) target = $region12
      $region11: #{tpu_custom_call.1} parent=5 // pred_region
        %s296 = ssub.s32 %s20, 1
        // Predicated region
        $region13: #{tpu_custom_call.1} parent=11 // pred_check
          %p297 = pneg %p67
        $region14: #{tpu_custom_call.1} parent=11 // pred_check_branch
          %299 = sbr.rel (%p297) target = $region16
        $region15: #{tpu_custom_call.1} parent=11 // pred_region
          _
        $region16: #{tpu_custom_call.1} parent=11 // pred_fallthru
          _
        // Predicated region
        $region17: #{tpu_custom_call.1} parent=11 // pred_check
          %p300 = pneg %p88
        $region18: #{tpu_custom_call.1} parent=11 // pred_check_branch
          %302 = sbr.rel (%p300) target = $region20
        $region19: #{tpu_custom_call.1} parent=11 // pred_region
          _
        $region20: #{tpu_custom_call.1} parent=11 // pred_fallthru
          _
        // Predicated region
        $region21: #{tpu_custom_call.1} parent=11 // pred_check
          %p303 = pneg %p109
        $region22: #{tpu_custom_call.1} parent=11 // pred_check_branch
          %305 = sbr.rel (%p303) target = $region24
        $region23: #{tpu_custom_call.1} parent=11 // pred_region
          _
        $region24: #{tpu_custom_call.1} parent=11 // pred_fallthru
          _
        // Predicated region
        $region25: #{tpu_custom_call.1} parent=11 // pred_check
          %p306 = pneg %p130
        $region26: #{tpu_custom_call.1} parent=11 // pred_check_branch
          %308 = sbr.rel (%p306) target = $region28
        $region27: #{tpu_custom_call.1} parent=11 // pred_region
          _
        $region28: #{tpu_custom_call.1} parent=11 // pred_fallthru
          _
        // Predicated region
        $region29: #{tpu_custom_call.1} parent=11 // pred_check
          %p309 = pneg %p151
        $region30: #{tpu_custom_call.1} parent=11 // pred_check_branch
          %311 = sbr.rel (%p309) target = $region32
        $region31: #{tpu_custom_call.1} parent=11 // pred_region
          _
        $region32: #{tpu_custom_call.1} parent=11 // pred_fallthru
          _
        // Predicated region
        $region33: #{tpu_custom_call.1} parent=11 // pred_check
          %p312 = pneg %p172
        $region34: #{tpu_custom_call.1} parent=11 // pred_check_branch
          %314 = sbr.rel (%p312) target = $region36
        $region35: #{tpu_custom_call.1} parent=11 // pred_region
          _
        $region36: #{tpu_custom_call.1} parent=11 // pred_fallthru
          _
        // Predicated region
        $region37: #{tpu_custom_call.1} parent=11 // pred_check
          %p315 = pneg %p193
        $region38: #{tpu_custom_call.1} parent=11 // pred_check_branch
          %317 = sbr.rel (%p315) target = $region40
        $region39: #{tpu_custom_call.1} parent=11 // pred_region
          _
        $region40: #{tpu_custom_call.1} parent=11 // pred_fallthru
          _
        // Predicated region
        $region41: #{tpu_custom_call.1} parent=11 // pred_check
          %p318 = pneg %p214
        $region42: #{tpu_custom_call.1} parent=11 // pred_check_branch
          %320 = sbr.rel (%p318) target = $region44
        $region43: #{tpu_custom_call.1} parent=11 // pred_region
          _
        $region44: #{tpu_custom_call.1} parent=11 // pred_fallthru
          _
        // Predicated region
        $region45: #{tpu_custom_call.1} parent=11 // pred_check
          %p321 = pneg %p235
        $region46: #{tpu_custom_call.1} parent=11 // pred_check_branch
          %323 = sbr.rel (%p321) target = $region48
        $region47: #{tpu_custom_call.1} parent=11 // pred_region
          _
        $region48: #{tpu_custom_call.1} parent=11 // pred_fallthru
          _
        // Predicated region
        $region49: #{tpu_custom_call.1} parent=11 // pred_check
          %p324 = pneg %p256
        $region50: #{tpu_custom_call.1} parent=11 // pred_check_branch
          %326 = sbr.rel (%p324) target = $region52
        $region51: #{tpu_custom_call.1} parent=11 // pred_region
          _
        $region52: #{tpu_custom_call.1} parent=11 // pred_fallthru
          _
      $region12: #{tpu_custom_call.1} parent=5 // pred_fallthru
        _
      %p327 = scmp.lt.s32.totalorder %s20, 2
      // Predicated region
      $region53: #{tpu_custom_call.1} parent=5 // pred_check
        %p328 = pneg %p327
      $region54: #{tpu_custom_call.1} parent=5 // pred_check_branch
        %330 = sbr.rel (%p328) target = $region56
      $region55: #{tpu_custom_call.1} parent=5 // pred_region
        // Predicated region
        $region57: #{tpu_custom_call.1} parent=55 // pred_check
          %p331 = pneg %p40
        $region58: #{tpu_custom_call.1} parent=55 // pred_check_branch
          %333 = sbr.rel (%p331) target = $region60
        $region59: #{tpu_custom_call.1} parent=55 // pred_region
          %p334 = scmp.lt.s32.totalorder %s20, 1
          %s335 = scalar_select %p334, %s20, 1
          %s336 = smul.addr %s335, 2
          %s337 = smul.addr %s336, 8
          %s338 = scalar_lea.vmem %s0, %s337
        $region60: #{tpu_custom_call.1} parent=55 // pred_fallthru
          _
      $region56: #{tpu_custom_call.1} parent=5 // pred_fallthru
        _
      %p339 = scmp.le.s32.totalorder 1, %s20
      %p340 = scmp.lt.s32.totalorder %s20, 3
      %p341 = pnand %p339, %p340
      %p342 = pneg %p341
      // Predicated region
      $region61: #{tpu_custom_call.1} parent=5 // pred_check
        _
      $region62: #{tpu_custom_call.1} parent=5 // pred_check_branch
        %344 = sbr.rel (%p341) target = $region64
      $region63: #{tpu_custom_call.1} parent=5 // pred_region
        %s345 = ssub.s32 %s20, 1
        %p346 = scmp.lt.s32.totalorder %s25, 1
        %s347 = scalar_select %p346, %s25, 1
        %s348 = smul.addr %s347, 2
        %s349 = smul.addr %s348, 8
        %s350 = scalar_lea.vmem %s0, %s349
        %p351 = pneg %p46
        %p352 = pneg %p43
        %p353 = pneg %p67
        %p354 = pneg %p64
        %p355 = pneg %p88
        %p356 = pneg %p85
        %p357 = pneg %p109
        %p358 = pneg %p106
        %p359 = pneg %p130
        %p360 = pneg %p127
        %p361 = pneg %p151
        %p362 = pneg %p148
        %p363 = pneg %p172
        %p364 = pneg %p169
        %p365 = pneg %p193
        %p366 = pneg %p190
        %p367 = pneg %p214
        %p368 = pneg %p211
        %p369 = pneg %p235
        %p370 = pneg %p232
        %p371 = pneg %p256
        %p372 = pneg %p253
        %p373 = pneg %p282
        %p374 = pneg %p279
        %s375 = sand.u32 %s269, 1
        %s376 = scalar_lea.sflag [#allocation3], %s375
        %s377 = sand.u32 %s269, 1
        %s378 = smul.addr %s377, 4
        %s379 = scalar_lea.vmem [#allocation2], %s378
        %p380 = scmp.lt.s32.totalorder %s25, 1
        %s381 = scalar_select %p380, %s25, 1
        %s382 = smul.addr %s381, 2
        %s383 = smul.addr %s382, 8
        %s384 = scalar_lea.vmem %s0, %s383
        %v385 = vld [vmem:[%s384] sm:$0xff]
        %v386 = vld [vmem:[%s384 + $0x8] sm:$0xff]
        %389 = vrot.lane.b32.xlu0 %v385, 17
        %v390 = vpop.permute.xlu0 %389
        %391 = vrot.lane.b32.xlu0 %v386, 17
        %v392 = vpop.permute.xlu0 %391
        %vm393 = vcmask 138240
        %v394 = vsel %vm393, %v390, %v392
        %v398 = vsel %vm393, 0.0, %v390
        %v399 = vsel %vm393, %v392, 0.0
        %v400 = vlaneseq
        %v401 = vand.u32 %v400, 127
        %v402 = vadd.s32 %v401, 128
        %vm403 = vcmp.lt.s32.totalorder %v401, 0
        %v404 = vsub.s32 0, %v401
        %v405 = vsel %vm403, %v404, %v401
        %v406 = vshrl.u32 %v405, 4
        %v407 = vand.u32 %v405, 15
        %v408 = vsub.s32 0, %v407
        %v409 = vsel %vm403, %v408, %v407
        %vm410 = vcmp.lt.s32.totalorder %v402, 0
        %v411 = vsub.s32 0, %v402
        %v412 = vsel %vm410, %v411, %v402
        %v413 = vshrl.u32 %v412, 4
        %v414 = vand.u32 %v412, 15
        %v415 = vsub.s32 0, %v414
        %v416 = vsel %vm410, %v415, %v414
        %vm417 = vcmp.ne.s32.totalorder %v409, 0
        %vm418 = vcmp.ne.s32.totalorder %v416, 0
        %vm419 = vcmp.lt.s32.totalorder %v409, 0
        %vm420 = vcmp.lt.s32.totalorder %v416, 0
        %vm421 = vmand %vm419, %vm417
        %vm422 = vmand %vm420, %vm418
        %v423 = vadd.s32 %v409, 16
        %v424 = vadd.s32 %v416, 16
        %v425 = vsel %vm421, %v423, %v409
        %v426 = vsel %vm422, %v424, %v416
        %vm427 = vcmp.gt.s32.totalorder %v425, 0
        %vm428 = vcmp.gt.s32.totalorder %v426, 0
        %v429 = vsel %vm427, 1, 0
        %v430 = vsel %vm428, 1, 0
        %vm431 = vcmp.eq.s32.totalorder %v429, 1
        %vm432 = vcmp.eq.s32.totalorder %v430, 1
        %v433 = vsel %vm431, %v398, 0.0
        %v434 = vsel %vm432, %v394, 0.0
        %v435 = vld [vmem:[%s1] sm:$0xff]
        %s436 = scalar_lea.vmem %s1, 8
        %v437 = vld [vmem:[%s436] sm:$0xff]
        %440 = vrot.lane.b32.xlu0 %v398, 127
        %v441 = vpop.permute.xlu0 %440
        %442 = vrot.lane.b32.xlu0 %v394, 127
        %v443 = vpop.permute.xlu0 %442
        %444 = vrot.lane.b32.xlu0 %v399, 127
        %v445 = vpop.permute.xlu0 %444
        %vm446 = vcmask 1039360
        %v447 = vsel %vm446, %v441, %v443
        %v448 = vsel %vm446, %v443, %v445
        %vm451 = vcmask 64512
        %v453 = vsel %vm451, %v437, 0
        %455 = vmatpush.msra.mxu0 0.0
        %456 = vmatpush.msra.mxu0 0.0
        %457 = vmatpush.msra.mxu0 0.0
        %458 = vmatpush.msra.mxu0 0.0
        %459 = vmatpush.msra.mxu0 0.0
        %460 = vmatpush.msra.mxu0 0.0
        %461 = vmatpush.msra.mxu0 0.0
        %462 = vmatpush.msra.mxu0 0.0
        %463 = vmatpush.msra.mxu0 0.0
        %464 = vmatpush.msra.mxu0 0.0
        %465 = vmatpush.msra.mxu0 0.0
        %466 = vmatpush.msra.mxu0 0.0
        %467 = vmatpush.msra.mxu0 0.0
        %468 = vmatpush.msra.mxu0 0.0
        %469 = vmatpush.msra.mxu0 0.0
        %470 = vmatpush.msra.mxu0 %v447
        %471 = vmatmul.f32.gmra.mxu0 %v453
        %v472 = vpop.f32.mrf.mxu0
        %v473 = vadd.f32 0.0, %v472
        %474 = vdwg.mxu0
        %475 = vmatpush.msra.mxu0 0.0
        %476 = vmatpush.msra.mxu0 0.0
        %477 = vmatpush.msra.mxu0 0.0
        %478 = vmatpush.msra.mxu0 0.0
        %479 = vmatpush.msra.mxu0 0.0
        %480 = vmatpush.msra.mxu0 0.0
        %481 = vmatpush.msra.mxu0 0.0
        %482 = vmatpush.msra.mxu0 0.0
        %483 = vmatpush.msra.mxu0 0.0
        %484 = vmatpush.msra.mxu0 0.0
        %485 = vmatpush.msra.mxu0 0.0
        %486 = vmatpush.msra.mxu0 0.0
        %487 = vmatpush.msra.mxu0 0.0
        %488 = vmatpush.msra.mxu0 0.0
        %489 = vmatpush.msra.mxu0 0.0
        %490 = vmatpush.msra.mxu0 %v448
        %491 = vmatmul.f32.gmra.mxu0 %v453
        %v492 = vpop.f32.mrf.mxu0
        %v493 = vadd.f32 0.0, %v492
        %494 = vdwg.mxu0
        %v496 = vsel %vm451, %v435, 0
        %498 = vmatpush.msra.mxu0 0.0
        %499 = vmatpush.msra.mxu0 0.0
        %500 = vmatpush.msra.mxu0 0.0
        %501 = vmatpush.msra.mxu0 0.0
        %502 = vmatpush.msra.mxu0 0.0
        %503 = vmatpush.msra.mxu0 0.0
        %504 = vmatpush.msra.mxu0 0.0
        %505 = vmatpush.msra.mxu0 0.0
        %506 = vmatpush.msra.mxu0 0.0
        %507 = vmatpush.msra.mxu0 0.0
        %508 = vmatpush.msra.mxu0 0.0
        %509 = vmatpush.msra.mxu0 0.0
        %510 = vmatpush.msra.mxu0 0.0
        %511 = vmatpush.msra.mxu0 0.0
        %512 = vmatpush.msra.mxu0 0.0
        %513 = vmatpush.msra.mxu0 %v433
        %514 = vmatmul.f32.gmra.mxu0 %v496
        %v515 = vpop.f32.mrf.mxu0
        %v516 = vadd.f32 %v473, %v515
        %517 = vdwg.mxu0
        %518 = vmatpush.msra.mxu0 0.0
        %519 = vmatpush.msra.mxu0 0.0
        %520 = vmatpush.msra.mxu0 0.0
        %521 = vmatpush.msra.mxu0 0.0
        %522 = vmatpush.msra.mxu0 0.0
        %523 = vmatpush.msra.mxu0 0.0
        %524 = vmatpush.msra.mxu0 0.0
        %525 = vmatpush.msra.mxu0 0.0
        %526 = vmatpush.msra.mxu0 0.0
        %527 = vmatpush.msra.mxu0 0.0
        %528 = vmatpush.msra.mxu0 0.0
        %529 = vmatpush.msra.mxu0 0.0
        %530 = vmatpush.msra.mxu0 0.0
        %531 = vmatpush.msra.mxu0 0.0
        %532 = vmatpush.msra.mxu0 0.0
        %533 = vmatpush.msra.mxu0 %v434
        %534 = vmatmul.f32.gmra.mxu0 %v496
        %v535 = vpop.f32.mrf.mxu0
        %v536 = vadd.f32 %v493, %v535
        %537 = vdwg.mxu0
        %vm538 = vcmp.lt.s32.totalorder %v425, 15
        %vm539 = vcmp.lt.s32.totalorder %v426, 15
        %v540 = vsel %vm538, 1, 0
        %v541 = vsel %vm539, 1, 0
        %vm542 = vcmp.eq.s32.totalorder %v540, 1
        %vm543 = vcmp.eq.s32.totalorder %v541, 1
        %544 = vrot.lane.b32.xlu0 %v398, 126
        %v545 = vpop.permute.xlu0 %544
        %546 = vrot.lane.b32.xlu0 %v394, 126
        %v547 = vpop.permute.xlu0 %546
        %548 = vrot.lane.b32.xlu0 %v399, 126
        %v549 = vpop.permute.xlu0 %548
        %vm550 = vcmask 1031168
        %v551 = vsel %vm550, %v545, %v547
        %v552 = vsel %vm550, %v547, %v549
        %v555 = vsel %vm542, %v551, 0.0
        %v556 = vsel %vm543, %v552, 0.0
        %s557 = scalar_lea.vmem %s1, 16
        %v558 = vld [vmem:[%s557] sm:$0xff]
        %v560 = vsel %vm451, %v558, 0
        %562 = vmatpush.msra.mxu0 0.0
        %563 = vmatpush.msra.mxu0 0.0
        %564 = vmatpush.msra.mxu0 0.0
        %565 = vmatpush.msra.mxu0 0.0
        %566 = vmatpush.msra.mxu0 0.0
        %567 = vmatpush.msra.mxu0 0.0
        %568 = vmatpush.msra.mxu0 0.0
        %569 = vmatpush.msra.mxu0 0.0
        %570 = vmatpush.msra.mxu0 0.0
        %571 = vmatpush.msra.mxu0 0.0
        %572 = vmatpush.msra.mxu0 0.0
        %573 = vmatpush.msra.mxu0 0.0
        %574 = vmatpush.msra.mxu0 0.0
        %575 = vmatpush.msra.mxu0 0.0
        %576 = vmatpush.msra.mxu0 0.0
        %577 = vmatpush.msra.mxu0 %v555
        %578 = vmatmul.f32.gmra.mxu0 %v560
        %v579 = vpop.f32.mrf.mxu0
        %v580 = vadd.f32 0.0, %v579
        %581 = vdwg.mxu0
        %582 = vmatpush.msra.mxu0 0.0
        %583 = vmatpush.msra.mxu0 0.0
        %584 = vmatpush.msra.mxu0 0.0
        %585 = vmatpush.msra.mxu0 0.0
        %586 = vmatpush.msra.mxu0 0.0
        %587 = vmatpush.msra.mxu0 0.0
        %588 = vmatpush.msra.mxu0 0.0
        %589 = vmatpush.msra.mxu0 0.0
        %590 = vmatpush.msra.mxu0 0.0
        %591 = vmatpush.msra.mxu0 0.0
        %592 = vmatpush.msra.mxu0 0.0
        %593 = vmatpush.msra.mxu0 0.0
        %594 = vmatpush.msra.mxu0 0.0
        %595 = vmatpush.msra.mxu0 0.0
        %596 = vmatpush.msra.mxu0 0.0
        %597 = vmatpush.msra.mxu0 %v556
        %598 = vmatmul.f32.gmra.mxu0 %v560
        %v599 = vpop.f32.mrf.mxu0
        %v600 = vadd.f32 0.0, %v599
        %601 = vdwg.mxu0
        %v602 = vadd.f32 %v516, %v580
        %v603 = vadd.f32 %v536, %v600
        %604 = vrot.lane.b32.xlu0 %v398, 112
        %v605 = vpop.permute.xlu0 %604
        %606 = vrot.lane.b32.xlu0 %v394, 112
        %v607 = vpop.permute.xlu0 %606
        %608 = vrot.lane.b32.xlu0 %v399, 112
        %v609 = vpop.permute.xlu0 %608
        %vm610 = vcmask 916480
        %v611 = vsel %vm610, %v605, %v607
        %v612 = vsel %vm610, %v607, %v609
        %v615 = vsel %vm431, %v611, 0.0
        %v616 = vsel %vm432, %v612, 0.0
        %s617 = scalar_lea.vmem %s1, 24
        %v618 = vld [vmem:[%s617] sm:$0xff]
        %v620 = vsel %vm451, %v618, 0
        %622 = vmatpush.msra.mxu0 0.0
        %623 = vmatpush.msra.mxu0 0.0
        %624 = vmatpush.msra.mxu0 0.0
        %625 = vmatpush.msra.mxu0 0.0
        %626 = vmatpush.msra.mxu0 0.0
        %627 = vmatpush.msra.mxu0 0.0
        %628 = vmatpush.msra.mxu0 0.0
        %629 = vmatpush.msra.mxu0 0.0
        %630 = vmatpush.msra.mxu0 0.0
        %631 = vmatpush.msra.mxu0 0.0
        %632 = vmatpush.msra.mxu0 0.0
        %633 = vmatpush.msra.mxu0 0.0
        %634 = vmatpush.msra.mxu0 0.0
        %635 = vmatpush.msra.mxu0 0.0
        %636 = vmatpush.msra.mxu0 0.0
        %637 = vmatpush.msra.mxu0 %v615
        %638 = vmatmul.f32.gmra.mxu0 %v620
        %v639 = vpop.f32.mrf.mxu0
        %v640 = vadd.f32 0.0, %v639
        %641 = vdwg.mxu0
        %642 = vmatpush.msra.mxu0 0.0
        %643 = vmatpush.msra.mxu0 0.0
        %644 = vmatpush.msra.mxu0 0.0
        %645 = vmatpush.msra.mxu0 0.0
        %646 = vmatpush.msra.mxu0 0.0
        %647 = vmatpush.msra.mxu0 0.0
        %648 = vmatpush.msra.mxu0 0.0
        %649 = vmatpush.msra.mxu0 0.0
        %650 = vmatpush.msra.mxu0 0.0
        %651 = vmatpush.msra.mxu0 0.0
        %652 = vmatpush.msra.mxu0 0.0
        %653 = vmatpush.msra.mxu0 0.0
        %654 = vmatpush.msra.mxu0 0.0
        %655 = vmatpush.msra.mxu0 0.0
        %656 = vmatpush.msra.mxu0 0.0
        %657 = vmatpush.msra.mxu0 %v616
        %658 = vmatmul.f32.gmra.mxu0 %v620
        %v659 = vpop.f32.mrf.mxu0
        %v660 = vadd.f32 0.0, %v659
        %661 = vdwg.mxu0
        %v662 = vadd.f32 %v602, %v640
        %v663 = vadd.f32 %v603, %v660
        %s664 = scalar_lea.vmem %s1, 32
        %v665 = vld [vmem:[%s664] sm:$0xff]
        %666 = vrot.lane.b32.xlu0 %v398, 111
        %v667 = vpop.permute.xlu0 %666
        %668 = vrot.lane.b32.xlu0 %v394, 111
        %v669 = vpop.permute.xlu0 %668
        %670 = vrot.lane.b32.xlu0 %v399, 111
        %v671 = vpop.permute.xlu0 %670
        %vm672 = vcmask 908288
        %v673 = vsel %vm672, %v667, %v669
        %v674 = vsel %vm672, %v669, %v671
        %v678 = vsel %vm451, %v665, 0
        %680 = vmatpush.msra.mxu0 0.0
        %681 = vmatpush.msra.mxu0 0.0
        %682 = vmatpush.msra.mxu0 0.0
        %683 = vmatpush.msra.mxu0 0.0
        %684 = vmatpush.msra.mxu0 0.0
        %685 = vmatpush.msra.mxu0 0.0
        %686 = vmatpush.msra.mxu0 0.0
        %687 = vmatpush.msra.mxu0 0.0
        %688 = vmatpush.msra.mxu0 0.0
        %689 = vmatpush.msra.mxu0 0.0
        %690 = vmatpush.msra.mxu0 0.0
        %691 = vmatpush.msra.mxu0 0.0
        %692 = vmatpush.msra.mxu0 0.0
        %693 = vmatpush.msra.mxu0 0.0
        %694 = vmatpush.msra.mxu0 0.0
        %695 = vmatpush.msra.mxu0 %v673
        %696 = vmatmul.f32.gmra.mxu0 %v678
        %v697 = vpop.f32.mrf.mxu0
        %v698 = vadd.f32 0.0, %v697
        %699 = vdwg.mxu0
        %700 = vmatpush.msra.mxu0 0.0
        %701 = vmatpush.msra.mxu0 0.0
        %702 = vmatpush.msra.mxu0 0.0
        %703 = vmatpush.msra.mxu0 0.0
        %704 = vmatpush.msra.mxu0 0.0
        %705 = vmatpush.msra.mxu0 0.0
        %706 = vmatpush.msra.mxu0 0.0
        %707 = vmatpush.msra.mxu0 0.0
        %708 = vmatpush.msra.mxu0 0.0
        %709 = vmatpush.msra.mxu0 0.0
        %710 = vmatpush.msra.mxu0 0.0
        %711 = vmatpush.msra.mxu0 0.0
        %712 = vmatpush.msra.mxu0 0.0
        %713 = vmatpush.msra.mxu0 0.0
        %714 = vmatpush.msra.mxu0 0.0
        %715 = vmatpush.msra.mxu0 %v674
        %716 = vmatmul.f32.gmra.mxu0 %v678
        %v717 = vpop.f32.mrf.mxu0
        %v718 = vadd.f32 0.0, %v717
        %719 = vdwg.mxu0
        %v720 = vadd.f32 %v662, %v698
        %v721 = vadd.f32 %v663, %v718
        %722 = vrot.lane.b32.xlu0 %v398, 110
        %v723 = vpop.permute.xlu0 %722
        %724 = vrot.lane.b32.xlu0 %v394, 110
        %v725 = vpop.permute.xlu0 %724
        %726 = vrot.lane.b32.xlu0 %v399, 110
        %v727 = vpop.permute.xlu0 %726
        %vm728 = vcmask 900096
        %v729 = vsel %vm728, %v723, %v725
        %v730 = vsel %vm728, %v725, %v727
        %v733 = vsel %vm542, %v729, 0.0
        %v734 = vsel %vm543, %v730, 0.0
        %s735 = scalar_lea.vmem %s1, 40
        %v736 = vld [vmem:[%s735] sm:$0xff]
        %v738 = vsel %vm451, %v736, 0
        %740 = vmatpush.msra.mxu0 0.0
        %741 = vmatpush.msra.mxu0 0.0
        %742 = vmatpush.msra.mxu0 0.0
        %743 = vmatpush.msra.mxu0 0.0
        %744 = vmatpush.msra.mxu0 0.0
        %745 = vmatpush.msra.mxu0 0.0
        %746 = vmatpush.msra.mxu0 0.0
        %747 = vmatpush.msra.mxu0 0.0
        %748 = vmatpush.msra.mxu0 0.0
        %749 = vmatpush.msra.mxu0 0.0
        %750 = vmatpush.msra.mxu0 0.0
        %751 = vmatpush.msra.mxu0 0.0
        %752 = vmatpush.msra.mxu0 0.0
        %753 = vmatpush.msra.mxu0 0.0
        %754 = vmatpush.msra.mxu0 0.0
        %755 = vmatpush.msra.mxu0 %v733
        %756 = vmatmul.f32.gmra.mxu0 %v738
        %v757 = vpop.f32.mrf.mxu0
        %v758 = vadd.f32 0.0, %v757
        %759 = vdwg.mxu0
        %760 = vmatpush.msra.mxu0 0.0
        %761 = vmatpush.msra.mxu0 0.0
        %762 = vmatpush.msra.mxu0 0.0
        %763 = vmatpush.msra.mxu0 0.0
        %764 = vmatpush.msra.mxu0 0.0
        %765 = vmatpush.msra.mxu0 0.0
        %766 = vmatpush.msra.mxu0 0.0
        %767 = vmatpush.msra.mxu0 0.0
        %768 = vmatpush.msra.mxu0 0.0
        %769 = vmatpush.msra.mxu0 0.0
        %770 = vmatpush.msra.mxu0 0.0
        %771 = vmatpush.msra.mxu0 0.0
        %772 = vmatpush.msra.mxu0 0.0
        %773 = vmatpush.msra.mxu0 0.0
        %774 = vmatpush.msra.mxu0 0.0
        %775 = vmatpush.msra.mxu0 %v734
        %776 = vmatmul.f32.gmra.mxu0 %v738
        %v777 = vpop.f32.mrf.mxu0
        %v778 = vadd.f32 0.0, %v777
        %779 = vdwg.mxu0
        %v780 = vadd.f32 %v720, %v758
        %v781 = vadd.f32 %v721, %v778
        %782 = vrot.lane.b32.xlu0 %v398, 96
        %v783 = vpop.permute.xlu0 %782
        %784 = vrot.lane.b32.xlu0 %v394, 96
        %v785 = vpop.permute.xlu0 %784
        %786 = vrot.lane.b32.xlu0 %v399, 96
        %v787 = vpop.permute.xlu0 %786
        %vm788 = vcmask 785408
        %v789 = vsel %vm788, %v783, %v785
        %v790 = vsel %vm788, %v785, %v787
        %v793 = vsel %vm431, %v789, 0.0
        %v794 = vsel %vm432, %v790, 0.0
        %s795 = scalar_lea.vmem %s1, 48
        %v796 = vld [vmem:[%s795] sm:$0xff]
        %v798 = vsel %vm451, %v796, 0
        %800 = vmatpush.msra.mxu0 0.0
        %801 = vmatpush.msra.mxu0 0.0
        %802 = vmatpush.msra.mxu0 0.0
        %803 = vmatpush.msra.mxu0 0.0
        %804 = vmatpush.msra.mxu0 0.0
        %805 = vmatpush.msra.mxu0 0.0
        %806 = vmatpush.msra.mxu0 0.0
        %807 = vmatpush.msra.mxu0 0.0
        %808 = vmatpush.msra.mxu0 0.0
        %809 = vmatpush.msra.mxu0 0.0
        %810 = vmatpush.msra.mxu0 0.0
        %811 = vmatpush.msra.mxu0 0.0
        %812 = vmatpush.msra.mxu0 0.0
        %813 = vmatpush.msra.mxu0 0.0
        %814 = vmatpush.msra.mxu0 0.0
        %815 = vmatpush.msra.mxu0 %v793
        %816 = vmatmul.f32.gmra.mxu0 %v798
        %v817 = vpop.f32.mrf.mxu0
        %v818 = vadd.f32 0.0, %v817
        %819 = vdwg.mxu0
        %820 = vmatpush.msra.mxu0 0.0
        %821 = vmatpush.msra.mxu0 0.0
        %822 = vmatpush.msra.mxu0 0.0
        %823 = vmatpush.msra.mxu0 0.0
        %824 = vmatpush.msra.mxu0 0.0
        %825 = vmatpush.msra.mxu0 0.0
        %826 = vmatpush.msra.mxu0 0.0
        %827 = vmatpush.msra.mxu0 0.0
        %828 = vmatpush.msra.mxu0 0.0
        %829 = vmatpush.msra.mxu0 0.0
        %830 = vmatpush.msra.mxu0 0.0
        %831 = vmatpush.msra.mxu0 0.0
        %832 = vmatpush.msra.mxu0 0.0
        %833 = vmatpush.msra.mxu0 0.0
        %834 = vmatpush.msra.mxu0 0.0
        %835 = vmatpush.msra.mxu0 %v794
        %836 = vmatmul.f32.gmra.mxu0 %v798
        %v837 = vpop.f32.mrf.mxu0
        %v838 = vadd.f32 0.0, %v837
        %839 = vdwg.mxu0
        %v840 = vadd.f32 %v780, %v818
        %v841 = vadd.f32 %v781, %v838
        %s842 = scalar_lea.vmem %s1, 56
        %v843 = vld [vmem:[%s842] sm:$0xff]
        %844 = vrot.lane.b32.xlu0 %v398, 95
        %v845 = vpop.permute.xlu0 %844
        %846 = vrot.lane.b32.xlu0 %v394, 95
        %v847 = vpop.permute.xlu0 %846
        %848 = vrot.lane.b32.xlu0 %v399, 95
        %v849 = vpop.permute.xlu0 %848
        %vm850 = vcmask 777216
        %v851 = vsel %vm850, %v845, %v847
        %v852 = vsel %vm850, %v847, %v849
        %v856 = vsel %vm451, %v843, 0
        %858 = vmatpush.msra.mxu0 0.0
        %859 = vmatpush.msra.mxu0 0.0
        %860 = vmatpush.msra.mxu0 0.0
        %861 = vmatpush.msra.mxu0 0.0
        %862 = vmatpush.msra.mxu0 0.0
        %863 = vmatpush.msra.mxu0 0.0
        %864 = vmatpush.msra.mxu0 0.0
        %865 = vmatpush.msra.mxu0 0.0
        %866 = vmatpush.msra.mxu0 0.0
        %867 = vmatpush.msra.mxu0 0.0
        %868 = vmatpush.msra.mxu0 0.0
        %869 = vmatpush.msra.mxu0 0.0
        %870 = vmatpush.msra.mxu0 0.0
        %871 = vmatpush.msra.mxu0 0.0
        %872 = vmatpush.msra.mxu0 0.0
        %873 = vmatpush.msra.mxu0 %v851
        %874 = vmatmul.f32.gmra.mxu0 %v856
        %v875 = vpop.f32.mrf.mxu0
        %v876 = vadd.f32 0.0, %v875
        %877 = vdwg.mxu0
        %878 = vmatpush.msra.mxu0 0.0
        %879 = vmatpush.msra.mxu0 0.0
        %880 = vmatpush.msra.mxu0 0.0
        %881 = vmatpush.msra.mxu0 0.0
        %882 = vmatpush.msra.mxu0 0.0
        %883 = vmatpush.msra.mxu0 0.0
        %884 = vmatpush.msra.mxu0 0.0
        %885 = vmatpush.msra.mxu0 0.0
        %886 = vmatpush.msra.mxu0 0.0
        %887 = vmatpush.msra.mxu0 0.0
        %888 = vmatpush.msra.mxu0 0.0
        %889 = vmatpush.msra.mxu0 0.0
        %890 = vmatpush.msra.mxu0 0.0
        %891 = vmatpush.msra.mxu0 0.0
        %892 = vmatpush.msra.mxu0 0.0
        %893 = vmatpush.msra.mxu0 %v852
        %894 = vmatmul.f32.gmra.mxu0 %v856
        %v895 = vpop.f32.mrf.mxu0
        %v896 = vadd.f32 0.0, %v895
        %897 = vdwg.mxu0
        %v898 = vadd.f32 %v840, %v876
        %v899 = vadd.f32 %v841, %v896
        %900 = vrot.lane.b32.xlu0 %v398, 94
        %v901 = vpop.permute.xlu0 %900
        %902 = vrot.lane.b32.xlu0 %v394, 94
        %v903 = vpop.permute.xlu0 %902
        %904 = vrot.lane.b32.xlu0 %v399, 94
        %v905 = vpop.permute.xlu0 %904
        %vm906 = vcmask 769024
        %v907 = vsel %vm906, %v901, %v903
        %v908 = vsel %vm906, %v903, %v905
        %v911 = vsel %vm542, %v907, 0.0
        %v912 = vsel %vm543, %v908, 0.0
        %s913 = scalar_lea.vmem %s1, 64
        %v914 = vld [vmem:[%s913] sm:$0xff]
        %v916 = vsel %vm451, %v914, 0
        %918 = vmatpush.msra.mxu0 0.0
        %919 = vmatpush.msra.mxu0 0.0
        %920 = vmatpush.msra.mxu0 0.0
        %921 = vmatpush.msra.mxu0 0.0
        %922 = vmatpush.msra.mxu0 0.0
        %923 = vmatpush.msra.mxu0 0.0
        %924 = vmatpush.msra.mxu0 0.0
        %925 = vmatpush.msra.mxu0 0.0
        %926 = vmatpush.msra.mxu0 0.0
        %927 = vmatpush.msra.mxu0 0.0
        %928 = vmatpush.msra.mxu0 0.0
        %929 = vmatpush.msra.mxu0 0.0
        %930 = vmatpush.msra.mxu0 0.0
        %931 = vmatpush.msra.mxu0 0.0
        %932 = vmatpush.msra.mxu0 0.0
        %933 = vmatpush.msra.mxu0 %v911
        %934 = vmatmul.f32.gmra.mxu0 %v916
        %v935 = vpop.f32.mrf.mxu0
        %v936 = vadd.f32 0.0, %v935
        %937 = vdwg.mxu0
        %938 = vmatpush.msra.mxu0 0.0
        %939 = vmatpush.msra.mxu0 0.0
        %940 = vmatpush.msra.mxu0 0.0
        %941 = vmatpush.msra.mxu0 0.0
        %942 = vmatpush.msra.mxu0 0.0
        %943 = vmatpush.msra.mxu0 0.0
        %944 = vmatpush.msra.mxu0 0.0
        %945 = vmatpush.msra.mxu0 0.0
        %946 = vmatpush.msra.mxu0 0.0
        %947 = vmatpush.msra.mxu0 0.0
        %948 = vmatpush.msra.mxu0 0.0
        %949 = vmatpush.msra.mxu0 0.0
        %950 = vmatpush.msra.mxu0 0.0
        %951 = vmatpush.msra.mxu0 0.0
        %952 = vmatpush.msra.mxu0 0.0
        %953 = vmatpush.msra.mxu0 %v912
        %954 = vmatmul.f32.gmra.mxu0 %v916
        %v955 = vpop.f32.mrf.mxu0
        %v956 = vadd.f32 0.0, %v955
        %957 = vdwg.mxu0
        %v958 = vadd.f32 %v898, %v936
        %v959 = vadd.f32 %v899, %v956
        %v960 = vld [vmem:[%s2] sm:$0xff]
        %962 = vset.pattern.permute.xlu0 0
        %963 = vperm.xlu0 %962, %v960
        %v964 = vpop.permute.xlu0 %963
        %v966 = vadd.f32 %v958, %v964
        %v967 = vadd.f32 %v959, %v964
        %vm968 = vcmp.ge.f32.partialorder %v966, 0.0
        %vm969 = vcmp.ge.f32.partialorder %v967, 0.0
        %v970 = vld [vmem:[%s3] sm:$0xff]
        %972 = vset.pattern.permute.xlu0 0
        %973 = vperm.xlu0 %972, %v970
        %v974 = vpop.permute.xlu0 %973
        %v976 = vmul.f32 %v974, %v966
        %v977 = vmul.f32 %v974, %v967
        %v978 = vsel %vm968, %v966, %v976
        %v979 = vsel %vm969, %v967, %v977
        %981 = vrot.lane.b32.xlu0 %v978, 112
        %v982 = vpop.permute.xlu0 %981
        %984 = vrot.lane.b32.xlu0 %v978, 96
        %v985 = vpop.permute.xlu0 %984
        %987 = vrot.lane.b32.xlu0 %v978, 80
        %v988 = vpop.permute.xlu0 %987
        %991 = vrot.lane.b32.xlu0 %v979, 64
        %v992 = vpop.permute.xlu0 %991
        %994 = vrot.lane.b32.xlu0 %v979, 48
        %v995 = vpop.permute.xlu0 %994
        %997 = vrot.lane.b32.xlu0 %v979, 32
        %v998 = vpop.permute.xlu0 %997
        %1000 = vrot.lane.b32.xlu0 %v979, 16
        %v1001 = vpop.permute.xlu0 %1000
        %vm1003 = vcmask 130048
        %v1004 = vsel %vm1003, %v978, %v982
        %vm1005 = vcmask 261120
        %v1006 = vsel %vm1005, %v1004, %v985
        %vm1007 = vcmask 392192
        %v1008 = vsel %vm1007, %v1006, %v988
        %vm1009 = vcmask 523264
        %v1010 = vsel %vm1009, %v1008, %v992
        %vm1011 = vcmask 654336
        %v1012 = vsel %vm1011, %v1010, %v995
        %v1013 = vsel %vm788, %v1012, %v998
        %v1014 = vsel %vm610, %v1013, %v1001
        %1016 = vrot.lane.b32.xlu0 %v1014, 17
        %v1017 = vpop.permute.xlu0 %1016
        %v1019 = vsel %vm393, 0.0, %v1017
        %v1020 = vsel %vm393, %v1017, 0.0
        %v1021 = vsel %vm431, %v1019, 0.0
        %v1022 = vld [vmem:[%s4] sm:$0xff]
        %s1023 = scalar_lea.vmem %s4, 8
        %v1024 = vld [vmem:[%s1023] sm:$0xff]
        %1027 = vrot.lane.b32.xlu0 %v1019, 127
        %v1028 = vpop.permute.xlu0 %1027
        %1029 = vrot.lane.b32.xlu0 %v1020, 127
        %v1030 = vpop.permute.xlu0 %1029
        %v1031 = vsel %vm446, %v1028, %v1030
        %v1034 = vsel %vm451, %v1024, 0
        %1036 = vmatpush.msra.mxu0 0.0
        %1037 = vmatpush.msra.mxu0 0.0
        %1038 = vmatpush.msra.mxu0 0.0
        %1039 = vmatpush.msra.mxu0 0.0
        %1040 = vmatpush.msra.mxu0 0.0
        %1041 = vmatpush.msra.mxu0 0.0
        %1042 = vmatpush.msra.mxu0 0.0
        %1043 = vmatpush.msra.mxu0 0.0
        %1044 = vmatpush.msra.mxu0 0.0
        %1045 = vmatpush.msra.mxu0 0.0
        %1046 = vmatpush.msra.mxu0 0.0
        %1047 = vmatpush.msra.mxu0 0.0
        %1048 = vmatpush.msra.mxu0 0.0
        %1049 = vmatpush.msra.mxu0 0.0
        %1050 = vmatpush.msra.mxu0 0.0
        %1051 = vmatpush.msra.mxu0 %v1031
        %1052 = vmatmul.f32.gmra.mxu0 %v1034
        %v1053 = vpop.f32.mrf.mxu0
        %v1054 = vadd.f32 0.0, %v1053
        %1055 = vdwg.mxu0
        %v1057 = vsel %vm451, %v1022, 0
        %1059 = vmatpush.msra.mxu0 0.0
        %1060 = vmatpush.msra.mxu0 0.0
        %1061 = vmatpush.msra.mxu0 0.0
        %1062 = vmatpush.msra.mxu0 0.0
        %1063 = vmatpush.msra.mxu0 0.0
        %1064 = vmatpush.msra.mxu0 0.0
        %1065 = vmatpush.msra.mxu0 0.0
        %1066 = vmatpush.msra.mxu0 0.0
        %1067 = vmatpush.msra.mxu0 0.0
        %1068 = vmatpush.msra.mxu0 0.0
        %1069 = vmatpush.msra.mxu0 0.0
        %1070 = vmatpush.msra.mxu0 0.0
        %1071 = vmatpush.msra.mxu0 0.0
        %1072 = vmatpush.msra.mxu0 0.0
        %1073 = vmatpush.msra.mxu0 0.0
        %1074 = vmatpush.msra.mxu0 %v1021
        %1075 = vmatmul.f32.gmra.mxu0 %v1057
        %v1076 = vpop.f32.mrf.mxu0
        %v1077 = vadd.f32 %v1054, %v1076
        %1078 = vdwg.mxu0
        %1079 = vrot.lane.b32.xlu0 %v1019, 126
        %v1080 = vpop.permute.xlu0 %1079
        %1081 = vrot.lane.b32.xlu0 %v1020, 126
        %v1082 = vpop.permute.xlu0 %1081
        %v1083 = vsel %vm550, %v1080, %v1082
        %v1085 = vsel %vm542, %v1083, 0.0
        %s1086 = scalar_lea.vmem %s4, 16
        %v1087 = vld [vmem:[%s1086] sm:$0xff]
        %v1089 = vsel %vm451, %v1087, 0
        %1091 = vmatpush.msra.mxu0 0.0
        %1092 = vmatpush.msra.mxu0 0.0
        %1093 = vmatpush.msra.mxu0 0.0
        %1094 = vmatpush.msra.mxu0 0.0
        %1095 = vmatpush.msra.mxu0 0.0
        %1096 = vmatpush.msra.mxu0 0.0
        %1097 = vmatpush.msra.mxu0 0.0
        %1098 = vmatpush.msra.mxu0 0.0
        %1099 = vmatpush.msra.mxu0 0.0
        %1100 = vmatpush.msra.mxu0 0.0
        %1101 = vmatpush.msra.mxu0 0.0
        %1102 = vmatpush.msra.mxu0 0.0
        %1103 = vmatpush.msra.mxu0 0.0
        %1104 = vmatpush.msra.mxu0 0.0
        %1105 = vmatpush.msra.mxu0 0.0
        %1106 = vmatpush.msra.mxu0 %v1085
        %1107 = vmatmul.f32.gmra.mxu0 %v1089
        %v1108 = vpop.f32.mrf.mxu0
        %v1109 = vadd.f32 0.0, %v1108
        %1110 = vdwg.mxu0
        %v1111 = vadd.f32 %v1077, %v1109
        %1112 = vrot.lane.b32.xlu0 %v1019, 112
        %v1113 = vpop.permute.xlu0 %1112
        %1114 = vrot.lane.b32.xlu0 %v1020, 112
        %v1115 = vpop.permute.xlu0 %1114
        %v1116 = vsel %vm610, %v1113, %v1115
        %v1118 = vsel %vm431, %v1116, 0.0
        %s1119 = scalar_lea.vmem %s4, 24
        %v1120 = vld [vmem:[%s1119] sm:$0xff]
        %v1122 = vsel %vm451, %v1120, 0
        %1124 = vmatpush.msra.mxu0 0.0
        %1125 = vmatpush.msra.mxu0 0.0
        %1126 = vmatpush.msra.mxu0 0.0
        %1127 = vmatpush.msra.mxu0 0.0
        %1128 = vmatpush.msra.mxu0 0.0
        %1129 = vmatpush.msra.mxu0 0.0
        %1130 = vmatpush.msra.mxu0 0.0
        %1131 = vmatpush.msra.mxu0 0.0
        %1132 = vmatpush.msra.mxu0 0.0
        %1133 = vmatpush.msra.mxu0 0.0
        %1134 = vmatpush.msra.mxu0 0.0
        %1135 = vmatpush.msra.mxu0 0.0
        %1136 = vmatpush.msra.mxu0 0.0
        %1137 = vmatpush.msra.mxu0 0.0
        %1138 = vmatpush.msra.mxu0 0.0
        %1139 = vmatpush.msra.mxu0 %v1118
        %1140 = vmatmul.f32.gmra.mxu0 %v1122
        %v1141 = vpop.f32.mrf.mxu0
        %v1142 = vadd.f32 0.0, %v1141
        %1143 = vdwg.mxu0
        %v1144 = vadd.f32 %v1111, %v1142
        %s1145 = scalar_lea.vmem %s4, 32
        %v1146 = vld [vmem:[%s1145] sm:$0xff]
        %1147 = vrot.lane.b32.xlu0 %v1019, 111
        %v1148 = vpop.permute.xlu0 %1147
        %1149 = vrot.lane.b32.xlu0 %v1020, 111
        %v1150 = vpop.permute.xlu0 %1149
        %v1151 = vsel %vm672, %v1148, %v1150
        %v1154 = vsel %vm451, %v1146, 0
        %1156 = vmatpush.msra.mxu0 0.0
        %1157 = vmatpush.msra.mxu0 0.0
        %1158 = vmatpush.msra.mxu0 0.0
        %1159 = vmatpush.msra.mxu0 0.0
        %1160 = vmatpush.msra.mxu0 0.0
        %1161 = vmatpush.msra.mxu0 0.0
        %1162 = vmatpush.msra.mxu0 0.0
        %1163 = vmatpush.msra.mxu0 0.0
        %1164 = vmatpush.msra.mxu0 0.0
        %1165 = vmatpush.msra.mxu0 0.0
        %1166 = vmatpush.msra.mxu0 0.0
        %1167 = vmatpush.msra.mxu0 0.0
        %1168 = vmatpush.msra.mxu0 0.0
        %1169 = vmatpush.msra.mxu0 0.0
        %1170 = vmatpush.msra.mxu0 0.0
        %1171 = vmatpush.msra.mxu0 %v1151
        %1172 = vmatmul.f32.gmra.mxu0 %v1154
        %v1173 = vpop.f32.mrf.mxu0
        %v1174 = vadd.f32 0.0, %v1173
        %1175 = vdwg.mxu0
        %v1176 = vadd.f32 %v1144, %v1174
        %1177 = vrot.lane.b32.xlu0 %v1019, 110
        %v1178 = vpop.permute.xlu0 %1177
        %1179 = vrot.lane.b32.xlu0 %v1020, 110
        %v1180 = vpop.permute.xlu0 %1179
        %v1181 = vsel %vm728, %v1178, %v1180
        %v1183 = vsel %vm542, %v1181, 0.0
        %s1184 = scalar_lea.vmem %s4, 40
        %v1185 = vld [vmem:[%s1184] sm:$0xff]
        %v1187 = vsel %vm451, %v1185, 0
        %1189 = vmatpush.msra.mxu0 0.0
        %1190 = vmatpush.msra.mxu0 0.0
        %1191 = vmatpush.msra.mxu0 0.0
        %1192 = vmatpush.msra.mxu0 0.0
        %1193 = vmatpush.msra.mxu0 0.0
        %1194 = vmatpush.msra.mxu0 0.0
        %1195 = vmatpush.msra.mxu0 0.0
        %1196 = vmatpush.msra.mxu0 0.0
        %1197 = vmatpush.msra.mxu0 0.0
        %1198 = vmatpush.msra.mxu0 0.0
        %1199 = vmatpush.msra.mxu0 0.0
        %1200 = vmatpush.msra.mxu0 0.0
        %1201 = vmatpush.msra.mxu0 0.0
        %1202 = vmatpush.msra.mxu0 0.0
        %1203 = vmatpush.msra.mxu0 0.0
        %1204 = vmatpush.msra.mxu0 %v1183
        %1205 = vmatmul.f32.gmra.mxu0 %v1187
        %v1206 = vpop.f32.mrf.mxu0
        %v1207 = vadd.f32 0.0, %v1206
        %1208 = vdwg.mxu0
        %v1209 = vadd.f32 %v1176, %v1207
        %1210 = vrot.lane.b32.xlu0 %v1019, 96
        %v1211 = vpop.permute.xlu0 %1210
        %1212 = vrot.lane.b32.xlu0 %v1020, 96
        %v1213 = vpop.permute.xlu0 %1212
        %v1214 = vsel %vm788, %v1211, %v1213
        %v1216 = vsel %vm431, %v1214, 0.0
        %s1217 = scalar_lea.vmem %s4, 48
        %v1218 = vld [vmem:[%s1217] sm:$0xff]
        %v1220 = vsel %vm451, %v1218, 0
        %1222 = vmatpush.msra.mxu0 0.0
        %1223 = vmatpush.msra.mxu0 0.0
        %1224 = vmatpush.msra.mxu0 0.0
        %1225 = vmatpush.msra.mxu0 0.0
        %1226 = vmatpush.msra.mxu0 0.0
        %1227 = vmatpush.msra.mxu0 0.0
        %1228 = vmatpush.msra.mxu0 0.0
        %1229 = vmatpush.msra.mxu0 0.0
        %1230 = vmatpush.msra.mxu0 0.0
        %1231 = vmatpush.msra.mxu0 0.0
        %1232 = vmatpush.msra.mxu0 0.0
        %1233 = vmatpush.msra.mxu0 0.0
        %1234 = vmatpush.msra.mxu0 0.0
        %1235 = vmatpush.msra.mxu0 0.0
        %1236 = vmatpush.msra.mxu0 0.0
        %1237 = vmatpush.msra.mxu0 %v1216
        %1238 = vmatmul.f32.gmra.mxu0 %v1220
        %v1239 = vpop.f32.mrf.mxu0
        %v1240 = vadd.f32 0.0, %v1239
        %1241 = vdwg.mxu0
        %v1242 = vadd.f32 %v1209, %v1240
        %s1243 = scalar_lea.vmem %s4, 56
        %v1244 = vld [vmem:[%s1243] sm:$0xff]
        %1245 = vrot.lane.b32.xlu0 %v1019, 95
        %v1246 = vpop.permute.xlu0 %1245
        %1247 = vrot.lane.b32.xlu0 %v1020, 95
        %v1248 = vpop.permute.xlu0 %1247
        %v1249 = vsel %vm850, %v1246, %v1248
        %v1252 = vsel %vm451, %v1244, 0
        %1254 = vmatpush.msra.mxu0 0.0
        %1255 = vmatpush.msra.mxu0 0.0
        %1256 = vmatpush.msra.mxu0 0.0
        %1257 = vmatpush.msra.mxu0 0.0
        %1258 = vmatpush.msra.mxu0 0.0
        %1259 = vmatpush.msra.mxu0 0.0
        %1260 = vmatpush.msra.mxu0 0.0
        %1261 = vmatpush.msra.mxu0 0.0
        %1262 = vmatpush.msra.mxu0 0.0
        %1263 = vmatpush.msra.mxu0 0.0
        %1264 = vmatpush.msra.mxu0 0.0
        %1265 = vmatpush.msra.mxu0 0.0
        %1266 = vmatpush.msra.mxu0 0.0
        %1267 = vmatpush.msra.mxu0 0.0
        %1268 = vmatpush.msra.mxu0 0.0
        %1269 = vmatpush.msra.mxu0 %v1249
        %1270 = vmatmul.f32.gmra.mxu0 %v1252
        %v1271 = vpop.f32.mrf.mxu0
        %v1272 = vadd.f32 0.0, %v1271
        %1273 = vdwg.mxu0
        %v1274 = vadd.f32 %v1242, %v1272
        %1275 = vrot.lane.b32.xlu0 %v1019, 94
        %v1276 = vpop.permute.xlu0 %1275
        %1277 = vrot.lane.b32.xlu0 %v1020, 94
        %v1278 = vpop.permute.xlu0 %1277
        %v1279 = vsel %vm906, %v1276, %v1278
        %v1281 = vsel %vm542, %v1279, 0.0
        %s1282 = scalar_lea.vmem %s4, 64
        %v1283 = vld [vmem:[%s1282] sm:$0xff]
        %v1285 = vsel %vm451, %v1283, 0
        %1287 = vmatpush.msra.mxu0 0.0
        %1288 = vmatpush.msra.mxu0 0.0
        %1289 = vmatpush.msra.mxu0 0.0
        %1290 = vmatpush.msra.mxu0 0.0
        %1291 = vmatpush.msra.mxu0 0.0
        %1292 = vmatpush.msra.mxu0 0.0
        %1293 = vmatpush.msra.mxu0 0.0
        %1294 = vmatpush.msra.mxu0 0.0
        %1295 = vmatpush.msra.mxu0 0.0
        %1296 = vmatpush.msra.mxu0 0.0
        %1297 = vmatpush.msra.mxu0 0.0
        %1298 = vmatpush.msra.mxu0 0.0
        %1299 = vmatpush.msra.mxu0 0.0
        %1300 = vmatpush.msra.mxu0 0.0
        %1301 = vmatpush.msra.mxu0 0.0
        %1302 = vmatpush.msra.mxu0 %v1281
        %1303 = vmatmul.f32.gmra.mxu0 %v1285
        %v1304 = vpop.f32.mrf.mxu0
        %v1305 = vadd.f32 0.0, %v1304
        %1306 = vdwg.mxu0
        %v1307 = vadd.f32 %v1274, %v1305
        %v1308 = vld [vmem:[%s5] sm:$0xff]
        %1310 = vset.pattern.permute.xlu0 0
        %1311 = vperm.xlu0 %1310, %v1308
        %v1312 = vpop.permute.xlu0 %1311
        %v1314 = vadd.f32 %v1307, %v1312
        %vm1315 = vcmp.ge.f32.partialorder %v1314, 0.0
        %v1316 = vld [vmem:[%s6] sm:$0xff]
        %1318 = vset.pattern.permute.xlu0 0
        %1319 = vperm.xlu0 %1318, %v1316
        %v1320 = vpop.permute.xlu0 %1319
        %v1322 = vmul.f32 %v1320, %v1314
        %v1323 = vsel %vm1315, %v1314, %v1322
        %1325 = vrot.lane.b32.xlu0 %v1323, 112
        %v1326 = vpop.permute.xlu0 %1325
        %1328 = vrot.lane.b32.xlu0 %v1323, 96
        %v1329 = vpop.permute.xlu0 %1328
        %1331 = vrot.lane.b32.xlu0 %v1323, 80
        %v1332 = vpop.permute.xlu0 %1331
        %v1334 = vsel %vm1003, %v1323, %v1326
        %v1335 = vsel %vm1005, %v1334, %v1329
        %v1336 = vsel %vm1007, %v1335, %v1332
        %1338 = vrot.lane.b32.xlu0 %v1336, 17
        %v1339 = vpop.permute.xlu0 %1338
        %v1341 = vsel %vm393, 0.0, %v1339
        %vm1342 = vcmask 662528
        %v1343 = vsel %vm1342, %v1341, 0.0
        %v1344 = vsel %vm431, %v1343, 0.0
        %v1345 = vld [vmem:[%s7] sm:$0xff]
        %s1346 = scalar_lea.vmem %s7, 8
        %v1347 = vld [vmem:[%s1346] sm:$0xff]
        %1349 = vrot.lane.b32.xlu0 %v1343, 127
        %v1350 = vpop.permute.xlu0 %1349
        %v1353 = vsel %vm451, %v1347, 0
        %1355 = vmatpush.msra.mxu0 0.0
        %1356 = vmatpush.msra.mxu0 0.0
        %1357 = vmatpush.msra.mxu0 0.0
        %1358 = vmatpush.msra.mxu0 0.0
        %1359 = vmatpush.msra.mxu0 0.0
        %1360 = vmatpush.msra.mxu0 0.0
        %1361 = vmatpush.msra.mxu0 0.0
        %1362 = vmatpush.msra.mxu0 0.0
        %1363 = vmatpush.msra.mxu0 0.0
        %1364 = vmatpush.msra.mxu0 0.0
        %1365 = vmatpush.msra.mxu0 0.0
        %1366 = vmatpush.msra.mxu0 0.0
        %1367 = vmatpush.msra.mxu0 0.0
        %1368 = vmatpush.msra.mxu0 0.0
        %1369 = vmatpush.msra.mxu0 0.0
        %1370 = vmatpush.msra.mxu0 %v1350
        %1371 = vmatmul.f32.gmra.mxu0 %v1353
        %v1372 = vpop.f32.mrf.mxu0
        %v1373 = vadd.f32 0.0, %v1372
        %1374 = vdwg.mxu0
        %v1376 = vsel %vm451, %v1345, 0
        %1378 = vmatpush.msra.mxu0 0.0
        %1379 = vmatpush.msra.mxu0 0.0
        %1380 = vmatpush.msra.mxu0 0.0
        %1381 = vmatpush.msra.mxu0 0.0
        %1382 = vmatpush.msra.mxu0 0.0
        %1383 = vmatpush.msra.mxu0 0.0
        %1384 = vmatpush.msra.mxu0 0.0
        %1385 = vmatpush.msra.mxu0 0.0
        %1386 = vmatpush.msra.mxu0 0.0
        %1387 = vmatpush.msra.mxu0 0.0
        %1388 = vmatpush.msra.mxu0 0.0
        %1389 = vmatpush.msra.mxu0 0.0
        %1390 = vmatpush.msra.mxu0 0.0
        %1391 = vmatpush.msra.mxu0 0.0
        %1392 = vmatpush.msra.mxu0 0.0
        %1393 = vmatpush.msra.mxu0 %v1344
        %1394 = vmatmul.f32.gmra.mxu0 %v1376
        %v1395 = vpop.f32.mrf.mxu0
        %v1396 = vadd.f32 %v1373, %v1395
        %1397 = vdwg.mxu0
        %1398 = vrot.lane.b32.xlu0 %v1343, 126
        %v1399 = vpop.permute.xlu0 %1398
        %v1401 = vsel %vm542, %v1399, 0.0
        %s1402 = scalar_lea.vmem %s7, 16
        %v1403 = vld [vmem:[%s1402] sm:$0xff]
        %v1405 = vsel %vm451, %v1403, 0
        %1407 = vmatpush.msra.mxu0 0.0
        %1408 = vmatpush.msra.mxu0 0.0
        %1409 = vmatpush.msra.mxu0 0.0
        %1410 = vmatpush.msra.mxu0 0.0
        %1411 = vmatpush.msra.mxu0 0.0
        %1412 = vmatpush.msra.mxu0 0.0
        %1413 = vmatpush.msra.mxu0 0.0
        %1414 = vmatpush.msra.mxu0 0.0
        %1415 = vmatpush.msra.mxu0 0.0
        %1416 = vmatpush.msra.mxu0 0.0
        %1417 = vmatpush.msra.mxu0 0.0
        %1418 = vmatpush.msra.mxu0 0.0
        %1419 = vmatpush.msra.mxu0 0.0
        %1420 = vmatpush.msra.mxu0 0.0
        %1421 = vmatpush.msra.mxu0 0.0
        %1422 = vmatpush.msra.mxu0 %v1401
        %1423 = vmatmul.f32.gmra.mxu0 %v1405
        %v1424 = vpop.f32.mrf.mxu0
        %v1425 = vadd.f32 0.0, %v1424
        %1426 = vdwg.mxu0
        %v1427 = vadd.f32 %v1396, %v1425
        %1428 = vrot.lane.b32.xlu0 %v1343, 112
        %v1429 = vpop.permute.xlu0 %1428
        %v1431 = vsel %vm431, %v1429, 0.0
        %s1432 = scalar_lea.vmem %s7, 24
        %v1433 = vld [vmem:[%s1432] sm:$0xff]
        %v1435 = vsel %vm451, %v1433, 0
        %1437 = vmatpush.msra.mxu0 0.0
        %1438 = vmatpush.msra.mxu0 0.0
        %1439 = vmatpush.msra.mxu0 0.0
        %1440 = vmatpush.msra.mxu0 0.0
        %1441 = vmatpush.msra.mxu0 0.0
        %1442 = vmatpush.msra.mxu0 0.0
        %1443 = vmatpush.msra.mxu0 0.0
        %1444 = vmatpush.msra.mxu0 0.0
        %1445 = vmatpush.msra.mxu0 0.0
        %1446 = vmatpush.msra.mxu0 0.0
        %1447 = vmatpush.msra.mxu0 0.0
        %1448 = vmatpush.msra.mxu0 0.0
        %1449 = vmatpush.msra.mxu0 0.0
        %1450 = vmatpush.msra.mxu0 0.0
        %1451 = vmatpush.msra.mxu0 0.0
        %1452 = vmatpush.msra.mxu0 %v1431
        %1453 = vmatmul.f32.gmra.mxu0 %v1435
        %v1454 = vpop.f32.mrf.mxu0
        %v1455 = vadd.f32 0.0, %v1454
        %1456 = vdwg.mxu0
        %v1457 = vadd.f32 %v1427, %v1455
        %s1458 = scalar_lea.vmem %s7, 32
        %v1459 = vld [vmem:[%s1458] sm:$0xff]
        %1460 = vrot.lane.b32.xlu0 %v1343, 111
        %v1461 = vpop.permute.xlu0 %1460
        %v1464 = vsel %vm451, %v1459, 0
        %1466 = vmatpush.msra.mxu0 0.0
        %1467 = vmatpush.msra.mxu0 0.0
        %1468 = vmatpush.msra.mxu0 0.0
        %1469 = vmatpush.msra.mxu0 0.0
        %1470 = vmatpush.msra.mxu0 0.0
        %1471 = vmatpush.msra.mxu0 0.0
        %1472 = vmatpush.msra.mxu0 0.0
        %1473 = vmatpush.msra.mxu0 0.0
        %1474 = vmatpush.msra.mxu0 0.0
        %1475 = vmatpush.msra.mxu0 0.0
        %1476 = vmatpush.msra.mxu0 0.0
        %1477 = vmatpush.msra.mxu0 0.0
        %1478 = vmatpush.msra.mxu0 0.0
        %1479 = vmatpush.msra.mxu0 0.0
        %1480 = vmatpush.msra.mxu0 0.0
        %1481 = vmatpush.msra.mxu0 %v1461
        %1482 = vmatmul.f32.gmra.mxu0 %v1464
        %v1483 = vpop.f32.mrf.mxu0
        %v1484 = vadd.f32 0.0, %v1483
        %1485 = vdwg.mxu0
        %v1486 = vadd.f32 %v1457, %v1484
        %1487 = vrot.lane.b32.xlu0 %v1343, 110
        %v1488 = vpop.permute.xlu0 %1487
        %v1490 = vsel %vm542, %v1488, 0.0
        %s1491 = scalar_lea.vmem %s7, 40
        %v1492 = vld [vmem:[%s1491] sm:$0xff]
        %v1494 = vsel %vm451, %v1492, 0
        %1496 = vmatpush.msra.mxu0 0.0
        %1497 = vmatpush.msra.mxu0 0.0
        %1498 = vmatpush.msra.mxu0 0.0
        %1499 = vmatpush.msra.mxu0 0.0
        %1500 = vmatpush.msra.mxu0 0.0
        %1501 = vmatpush.msra.mxu0 0.0
        %1502 = vmatpush.msra.mxu0 0.0
        %1503 = vmatpush.msra.mxu0 0.0
        %1504 = vmatpush.msra.mxu0 0.0
        %1505 = vmatpush.msra.mxu0 0.0
        %1506 = vmatpush.msra.mxu0 0.0
        %1507 = vmatpush.msra.mxu0 0.0
        %1508 = vmatpush.msra.mxu0 0.0
        %1509 = vmatpush.msra.mxu0 0.0
        %1510 = vmatpush.msra.mxu0 0.0
        %1511 = vmatpush.msra.mxu0 %v1490
        %1512 = vmatmul.f32.gmra.mxu0 %v1494
        %v1513 = vpop.f32.mrf.mxu0
        %v1514 = vadd.f32 0.0, %v1513
        %1515 = vdwg.mxu0
        %v1516 = vadd.f32 %v1486, %v1514
        %1517 = vrot.lane.b32.xlu0 %v1343, 96
        %v1518 = vpop.permute.xlu0 %1517
        %v1520 = vsel %vm431, %v1518, 0.0
        %s1521 = scalar_lea.vmem %s7, 48
        %v1522 = vld [vmem:[%s1521] sm:$0xff]
        %v1524 = vsel %vm451, %v1522, 0
        %1526 = vmatpush.msra.mxu0 0.0
        %1527 = vmatpush.msra.mxu0 0.0
        %1528 = vmatpush.msra.mxu0 0.0
        %1529 = vmatpush.msra.mxu0 0.0
        %1530 = vmatpush.msra.mxu0 0.0
        %1531 = vmatpush.msra.mxu0 0.0
        %1532 = vmatpush.msra.mxu0 0.0
        %1533 = vmatpush.msra.mxu0 0.0
        %1534 = vmatpush.msra.mxu0 0.0
        %1535 = vmatpush.msra.mxu0 0.0
        %1536 = vmatpush.msra.mxu0 0.0
        %1537 = vmatpush.msra.mxu0 0.0
        %1538 = vmatpush.msra.mxu0 0.0
        %1539 = vmatpush.msra.mxu0 0.0
        %1540 = vmatpush.msra.mxu0 0.0
        %1541 = vmatpush.msra.mxu0 %v1520
        %1542 = vmatmul.f32.gmra.mxu0 %v1524
        %v1543 = vpop.f32.mrf.mxu0
        %v1544 = vadd.f32 0.0, %v1543
        %1545 = vdwg.mxu0
        %v1546 = vadd.f32 %v1516, %v1544
        %s1547 = scalar_lea.vmem %s7, 56
        %v1548 = vld [vmem:[%s1547] sm:$0xff]
        %1549 = vrot.lane.b32.xlu0 %v1343, 95
        %v1550 = vpop.permute.xlu0 %1549
        %v1553 = vsel %vm451, %v1548, 0
        %1555 = vmatpush.msra.mxu0 0.0
        %1556 = vmatpush.msra.mxu0 0.0
        %1557 = vmatpush.msra.mxu0 0.0
        %1558 = vmatpush.msra.mxu0 0.0
        %1559 = vmatpush.msra.mxu0 0.0
        %1560 = vmatpush.msra.mxu0 0.0
        %1561 = vmatpush.msra.mxu0 0.0
        %1562 = vmatpush.msra.mxu0 0.0
        %1563 = vmatpush.msra.mxu0 0.0
        %1564 = vmatpush.msra.mxu0 0.0
        %1565 = vmatpush.msra.mxu0 0.0
        %1566 = vmatpush.msra.mxu0 0.0
        %1567 = vmatpush.msra.mxu0 0.0
        %1568 = vmatpush.msra.mxu0 0.0
        %1569 = vmatpush.msra.mxu0 0.0
        %1570 = vmatpush.msra.mxu0 %v1550
        %1571 = vmatmul.f32.gmra.mxu0 %v1553
        %v1572 = vpop.f32.mrf.mxu0
        %v1573 = vadd.f32 0.0, %v1572
        %1574 = vdwg.mxu0
        %v1575 = vadd.f32 %v1546, %v1573
        %1576 = vrot.lane.b32.xlu0 %v1343, 94
        %v1577 = vpop.permute.xlu0 %1576
        %v1579 = vsel %vm542, %v1577, 0.0
        %s1580 = scalar_lea.vmem %s7, 64
        %v1581 = vld [vmem:[%s1580] sm:$0xff]
        %v1583 = vsel %vm451, %v1581, 0
        %1585 = vmatpush.msra.mxu0 0.0
        %1586 = vmatpush.msra.mxu0 0.0
        %1587 = vmatpush.msra.mxu0 0.0
        %1588 = vmatpush.msra.mxu0 0.0
        %1589 = vmatpush.msra.mxu0 0.0
        %1590 = vmatpush.msra.mxu0 0.0
        %1591 = vmatpush.msra.mxu0 0.0
        %1592 = vmatpush.msra.mxu0 0.0
        %1593 = vmatpush.msra.mxu0 0.0
        %1594 = vmatpush.msra.mxu0 0.0
        %1595 = vmatpush.msra.mxu0 0.0
        %1596 = vmatpush.msra.mxu0 0.0
        %1597 = vmatpush.msra.mxu0 0.0
        %1598 = vmatpush.msra.mxu0 0.0
        %1599 = vmatpush.msra.mxu0 0.0
        %1600 = vmatpush.msra.mxu0 %v1579
        %1601 = vmatmul.f32.gmra.mxu0 %v1583
        %v1602 = vpop.f32.mrf.mxu0
        %v1603 = vadd.f32 0.0, %v1602
        %1604 = vdwg.mxu0
        %v1605 = vadd.f32 %v1575, %v1603
        %v1606 = vld [vmem:[%s8] sm:$0xff]
        %1608 = vset.pattern.permute.xlu0 0
        %1609 = vperm.xlu0 %1608, %v1606
        %v1610 = vpop.permute.xlu0 %1609
        %v1612 = vadd.f32 %v1605, %v1610
        %vm1613 = vcmp.ge.f32.partialorder %v1612, 0.0
        %v1614 = vld [vmem:[%s9] sm:$0xff]
        %1616 = vset.pattern.permute.xlu0 0
        %1617 = vperm.xlu0 %1616, %v1614
        %v1618 = vpop.permute.xlu0 %1617
        %v1620 = vmul.f32 %v1618, %v1612
        %v1621 = vsel %vm1613, %v1612, %v1620
        %1623 = vrot.lane.b32.xlu0 %v1621, 112
        %v1624 = vpop.permute.xlu0 %1623
        %v1626 = vsel %vm1003, %v1621, %v1624
        %1628 = vrot.lane.b32.xlu0 %v1626, 112
        %v1629 = vpop.permute.xlu0 %1628
        %v1630 = vld [vmem:[%s10] sm:$0xff]
        %v1631 = vld [vmem:[%s10 + $0x8] sm:$0xff]
        %v1632 = vsel %vm1003, %v1626, 0
        %v1634 = vsel %vm1003, %v1629, 0
        %1636 = vmatpush.msra.mxu0 0.0
        %1637 = vmatpush.msra.mxu0 0.0
        %1638 = vmatpush.msra.mxu0 0.0
        %1639 = vmatpush.msra.mxu0 0.0
        %1640 = vmatpush.msra.mxu0 0.0
        %1641 = vmatpush.msra.mxu0 0.0
        %1642 = vmatpush.msra.mxu0 0.0
        %1643 = vmatpush.msra.mxu0 0.0
        %1644 = vmatpush.msra.mxu0 0.0
        %1645 = vmatpush.msra.mxu0 0.0
        %1646 = vmatpush.msra.mxu0 0.0
        %1647 = vmatpush.msra.mxu0 0.0
        %1648 = vmatpush.msra.mxu0 0.0
        %1649 = vmatpush.msra.mxu0 0.0
        %1650 = vmatpush.msra.mxu0 %v1631
        %1651 = vmatpush.msra.mxu0 %v1630
        %1652 = vmatmul.f32.gmra.mxu0 %v1632
        %v1653 = vpop.f32.mrf.mxu0
        %v1654 = vadd.f32 0.0, %v1653
        %1655 = vmatmul.f32.gmra.mxu0 %v1634
        %v1656 = vpop.f32.mrf.mxu0
        %v1657 = vadd.f32 0.0, %v1656
        %1658 = vdwg.mxu0
        %1660 = vrot.lane.b32.xlu0 %v1657, 32
        %v1661 = vpop.permute.xlu0 %1660
        %v1663 = vsel %vm1005, %v1654, %v1661
        %vm1664 = vcmask 519168
        %1665 = vst.msk [vmem:[%s379] sm:$0xf] %vm1664, %v1663
        %s1666 = sand.u32 %s269, 1
        %s1667 = scalar_lea.sflag [#allocation3], %s1666
        %s1668 = sand.u32 %s269, 1
        %s1669 = smul.addr %s1668, 4
        %s1670 = scalar_lea.vmem [#allocation2], %s1669
        // Predicated region
        $region65: #{tpu_custom_call.1} parent=63 // pred_check
          %p1671 = pneg %p279
        $region66: #{tpu_custom_call.1} parent=63 // pred_check_branch
          %1673 = sbr.rel (%p1671) target = $region68
        $region67: #{tpu_custom_call.1} parent=63 // pred_region
          %1675 = vsyncadd %s1667, 0
          %s1676 = smul.addr %s25, 4
          %s1677 = scalar_lea.hbm %s11, %s1676
          %s1679 = sshll.u32 %s1670, 4
          %s1680 = int_to_ptr.vmem [resolvable:$true] %s1679
          %s1681 = sshll.u32 %s1677, 4
          %s1682 = int_to_ptr.hbm [resolvable:$true] %s1681
          %1684 = dma.vmem_to_hbm [thread:$0]  %s1680, 64, %s1682, %s1667
        $region68: #{tpu_custom_call.1} parent=63 // pred_fallthru
          _
      $region64: #{tpu_custom_call.1} parent=5 // pred_fallthru
        _
      %p1685 = scmp.le.s32.totalorder 2, %s20
      // Predicated region
      $region69: #{tpu_custom_call.1} parent=5 // pred_check
        %p1686 = pneg %p1685
      $region70: #{tpu_custom_call.1} parent=5 // pred_check_branch
        %1688 = sbr.rel (%p1686) target = $region72
      $region71: #{tpu_custom_call.1} parent=5 // pred_region
        %s1689 = ssub.s32 %s20, 2
        // Predicated region
        $region73: #{tpu_custom_call.1} parent=71 // pred_check
          %p1690 = pneg %p285
        $region74: #{tpu_custom_call.1} parent=71 // pred_check_branch
          %1692 = sbr.rel (%p1690) target = $region76
        $region75: #{tpu_custom_call.1} parent=71 // pred_region
          %s1693 = sand.u32 %s270, 1
          %s1694 = scalar_lea.sflag [#allocation3], %s1693
          %s1695 = sand.u32 %s270, 1
          %s1696 = smul.addr %s1695, 4
          %s1697 = scalar_lea.vmem [#allocation2], %s1696
          %1699 = dma.done %s1694, 64
        $region76: #{tpu_custom_call.1} parent=71 // pred_fallthru
          _
      $region72: #{tpu_custom_call.1} parent=5 // pred_fallthru
        _
    $region6: #{tpu_custom_call.1} parent=1 // loop_footer
      %s24 = sadd.s32 1, %s20
    $region7: #{tpu_custom_call.1} parent=1 // loop_footer_branch
      %19 = sbr.rel target = $region3
    $region8: #{tpu_custom_call.1} parent=1 // loop_exit
      _
    %1700 = vsyncpa [#allocation3], 1
    %s1701 = scalar_lea.sflag [#allocation3], 1
    %1702 = vsyncpa %s1701, 1

</llo_original>
